<compile_context>
chip_gen: v7x
topology: tpu7x:2x2x1
jax: 0.10.0
libtpu: 0.0.40
codegen_flags: <defaults>
</compile_context>

<pallas_src>
import functools

import jax
import jax.numpy as jnp
from jax.experimental import pallas as pl
from jax.experimental.pallas import tpu as pltpu


# --------------------------------------------------------------------------
# Kernel 1: [optional fused BN-apply + ReLU prologue] -> 3x3 conv (halo built
#           in a VMEM scratch) -> bf16 output + per-block BN partial stats.
# --------------------------------------------------------------------------
def conv_bn_kernel(x_ref, w_ref, scale_ref, bias_ref,
                   y_ref, sum_ref, sq_ref, xpad_ref, *, apply_prologue):
    # x_ref    : (Nb, H, W, Cin)      input tile (f32 x, or bf16 y1 for stage 2)
    # w_ref    : (3, 3*Cin, Cout)     bf16 weights laid out (dy, dx*Cin + cin, cout)
    # scale_ref, bias_ref : (1, Cin)  f32 BN scale/bias for the fused prologue
    # y_ref    : (Nb, H, W, Cout)     bf16 conv output
    # sum_ref, sq_ref : (1, 1, Cout)  f32 per-block partial sum / sum-of-squares
    # xpad_ref : (Nb, H+2, W+2, Cin)  f32 scratch holding the zero-padded tile
    Nb, H, W, Cout = y_ref.shape
    Cin = x_ref.shape[-1]
    M = Nb * H * W

    # ---- prologue: previous stage's BatchNorm-apply + ReLU fused here so the
    #      normalized activation never round-trips HBM.
    x = x_ref[...].astype(jnp.float32)
    if apply_prologue:
        x = jnp.maximum(x * scale_ref[...] + bias_ref[...], 0.0)

    # ---- build the zero-padded operand tile in VMEM (replaces wrapper jnp.pad).
    #      Zeroed every step (cheap) so "parallel" grid semantics stay safe.
    xpad_ref[...] = jnp.zeros_like(xpad_ref)
    xpad_ref[:, 1:H + 1, 1:W + 1, :] = x
    xp = xpad_ref[...]

    # ---- 3x3 conv as 3 fat MXU matmuls: M = Nb*H*W rows, K = 3*Cin (dx folded).
    acc = jnp.zeros((M, Cout), jnp.float32)
    for dy in range(3):
        slab = xp[:, dy:dy + H, :, :]                             # (Nb, H, W+2, Cin)
        patch = jnp.concatenate(
            [slab[:, :, dx:dx + W, :] for dx in range(3)], axis=-1)   # (Nb, H, W, 3*Cin)
        lhs = patch.reshape(M, 3 * Cin).astype(jnp.bfloat16)
        acc += jax.lax.dot_general(
            lhs, w_ref[dy],
            dimension_numbers=(((1,), (0,)), ((), ())),
            preferred_element_type=jnp.float32)

    y_ref[...] = acc.reshape(Nb, H, W, Cout).astype(y_ref.dtype)
    # Partial BN statistics from the f32 accumulator; reduced in the wrapper.
    sum_ref[...] = acc.sum(axis=0).reshape(1, 1, Cout)
    sq_ref[...] = (acc * acc).sum(axis=0).reshape(1, 1, Cout)


def _conv_stage(x, w_flat, scale_in, bias_in, *, nb, apply_prologue):
    N, H, W, Cin = x.shape
    Cout = w_flat.shape[-1]
    nblocks = N // nb
    kernel = functools.partial(conv_bn_kernel, apply_prologue=apply_prologue)
    return pl.pallas_call(
        kernel,
        out_shape=(
            jax.ShapeDtypeStruct((N, H, W, Cout), jnp.bfloat16),
            jax.ShapeDtypeStruct((nblocks, 1, Cout), jnp.float32),
            jax.ShapeDtypeStruct((nblocks, 1, Cout), jnp.float32),
        ),
        grid_spec=pltpu.PrefetchScalarGridSpec(
            num_scalar_prefetch=0,
            grid=(nblocks,),
            in_specs=[
                pl.BlockSpec((nb, H, W, Cin), lambda b: (b, 0, 0, 0)),
                pl.BlockSpec((3, 3 * Cin, Cout), lambda b: (0, 0, 0)),
                pl.BlockSpec((1, Cin), lambda b: (0, 0)),
                pl.BlockSpec((1, Cin), lambda b: (0, 0)),
            ],
            out_specs=[
                pl.BlockSpec((nb, H, W, Cout), lambda b: (b, 0, 0, 0)),
                pl.BlockSpec((1, 1, Cout), lambda b: (b, 0, 0)),
                pl.BlockSpec((1, 1, Cout), lambda b: (b, 0, 0)),
            ],
            scratch_shapes=[pltpu.VMEM((nb, H + 2, W + 2, Cin), jnp.float32)],
        ),
        compiler_params=pltpu.CompilerParams(
            # per-block partial stats -> no cross-step carries -> batch axis can
            # be sharded across v7x's two TensorCores.
            dimension_semantics=("parallel",)),
    )(x, w_flat, scale_in, bias_in)


# --------------------------------------------------------------------------
# Kernel 2: final BatchNorm-apply + ReLU on a lane-dense (rows, 128) view.
# --------------------------------------------------------------------------
def bn_relu_apply_kernel(y_ref, scale_ref, bias_ref, o_ref):
    y = y_ref[...].astype(jnp.float32)
    o_ref[...] = jnp.maximum(y * scale_ref[...] + bias_ref[...], 0.0).astype(o_ref.dtype)


def _pick_row_tile(rows, target=512):
    for tr in range(min(rows, target), 0, -1):
        if rows % tr == 0 and (tr % 8 == 0 or tr == rows):
            return tr
    return rows


def _bn_relu_apply(y, scale, bias):
    N, H, W, C = y.shape
    total = N * H * W * C
    # Lane-dense view: fold channel blocks so the last dim is 128-wide when possible.
    lanes = 128 if (C < 128 and 128 % C == 0 and total % 128 == 0) else C
    k = lanes // C
    rows = total // lanes
    y2d = y.reshape(rows, lanes)
    scale_l = jnp.tile(scale.astype(jnp.float32), k).reshape(1, lanes)
    bias_l = jnp.tile(bias.astype(jnp.float32), k).reshape(1, lanes)
    tr = _pick_row_tile(rows)
    out = pl.pallas_call(
        bn_relu_apply_kernel,
        out_shape=jax.ShapeDtypeStruct((rows, lanes), jnp.float32),
        grid_spec=pltpu.PrefetchScalarGridSpec(
            num_scalar_prefetch=0,
            grid=(rows // tr,),
            in_specs=[
                pl.BlockSpec((tr, lanes), lambda r: (r, 0)),
                pl.BlockSpec((1, lanes), lambda r: (0, 0)),
                pl.BlockSpec((1, lanes), lambda r: (0, 0)),
            ],
            out_specs=pl.BlockSpec((tr, lanes), lambda r: (r, 0)),
        ),
        compiler_params=pltpu.CompilerParams(dimension_semantics=("parallel",)),
    )(y2d, scale_l, bias_l)
    return out.reshape(N, H, W, C)


# --------------------------------------------------------------------------
# Wrapper helpers
# --------------------------------------------------------------------------
def _pick_batch_block(n, hw, cin, cout, target_rows=256,
                      vmem_budget_bytes=8 * 1024 * 1024):
    """Largest divisor of n so the per-step tile gives the MXU >= target_rows rows
    while staying well inside the per-core VMEM budget (conservative vs v7x's
    32 MiB default scoped VMEM)."""
    per_row = 20 * cin + 8 * cout  # rough live bytes per output row (pad+patch+acc+IO)
    best = 1
    for nb in range(1, n + 1):
        if n % nb:
            continue
        if nb > 1 and nb * hw * per_row > vmem_budget_bytes:
            break
        best = nb
        if nb * hw >= target_rows:
            break
    return best


def _bn_scale_bias(part_sums, part_sqs, gamma, beta, count, eps):
    # training-mode BatchNorm: batch statistics over (N, H, W), biased variance.
    mean = jnp.sum(part_sums, axis=(0, 1)) / count
    ex2 = jnp.sum(part_sqs, axis=(0, 1)) / count
    # single-pass E[x^2]-E[x]^2 can go slightly negative from cancellation; clamp.
    var = jnp.maximum(ex2 - mean * mean, 0.0)
    scale = gamma * jax.lax.rsqrt(var + eps)
    bias = beta - mean * scale
    return scale, bias


# --------------------------------------------------------------------------
# ConvBlock forward (matches the PyTorch nn.Sequential semantics)
# --------------------------------------------------------------------------
def conv_block_forward(x_nchw, params, eps=1e-5):
    x = jnp.transpose(x_nchw, (0, 2, 3, 1))          # NCHW -> NHWC
    N, H, W, Cin = x.shape
    C1 = params["w1"].shape[-1]
    C2 = params["w2"].shape[-1]
    count = N * H * W
    nb = _pick_batch_block(N, H * W, Cin, C1)

    # HWIO -> (dy, dx*Cin + cin, cout), bf16 for the MXU.
    w1 = params["w1"].astype(jnp.bfloat16).reshape(3, 3 * Cin, C1)
    w2 = params["w2"].astype(jnp.bfloat16).reshape(3, 3 * C1, C2)

    one = jnp.ones((1, Cin), jnp.float32)
    zero = jnp.zeros((1, Cin), jnp.float32)

    # stage 1: conv1 + partial BN1 stats (no prologue).
    y1, s1, q1 = _conv_stage(x, w1, one, zero, nb=nb, apply_prologue=False)
    scale1, bias1 = _bn_scale_bias(s1, q1, params["gamma1"], params["beta1"], count, eps)

    # stage 2: fused BN1-apply + ReLU prologue -> conv2 + partial BN2 stats.
    y2, s2, q2 = _conv_stage(y1, w2, scale1.reshape(1, C1), bias1.reshape(1, C1),
                             nb=nb, apply_prologue=True)
    scale2, bias2 = _bn_scale_bias(s2, q2, params["gamma2"], params["beta2"], count, eps)

    # final BN2-apply + ReLU (lane-dense elementwise kernel).
    h2 = _bn_relu_apply(y2, scale2, bias2)
    return jnp.transpose(h2, (0, 3, 1, 2))           # NHWC -> NCHW


# --------------------------------------------------------------------------
# Pure-JAX f32 reference (for correctness check only)
# --------------------------------------------------------------------------
def reference_forward(x_nchw, params, eps=1e-5):
    def stage(x, w_hwio, gamma, beta):
        w_oihw = jnp.transpose(w_hwio, (3, 2, 0, 1))
        y = jax.lax.conv_general_dilated(
            x, w_oihw, window_strides=(1, 1), padding=((1, 1), (1, 1)),
            dimension_numbers=("NCHW", "OIHW", "NCHW"))
        mean = y.mean(axis=(0, 2, 3), keepdims=True)
        var = ((y - mean) ** 2).mean(axis=(0, 2, 3), keepdims=True)
        yn = (y - mean) / jnp.sqrt(var + eps)
        yn = yn * gamma.reshape(1, -1, 1, 1) + beta.reshape(1, -1, 1, 1)
        return jnp.maximum(yn, 0.0)

    h = stage(x_nchw, params["w1"], params["gamma1"], params["beta1"])
    h = stage(h, params["w2"], params["gamma2"], params["beta2"])
    return h


if __name__ == "__main__":
    in_channel, expansion = 64, 1           # forward requires in_channel == 64*expansion
    cout = 64 * expansion
    N, H, W = 2, 8, 8

    key = jax.random.PRNGKey(0)
    k1, k2, k3, k4, k5, k6, kx = jax.random.split(key, 7)

    bound = 1.0 / jnp.sqrt(in_channel * 9.0)     # kaiming-uniform-like, deterministic
    params = {
        "w1": jax.random.uniform(k1, (3, 3, in_channel, cout), jnp.float32, -bound, bound),
        "w2": jax.random.uniform(k2, (3, 3, cout, cout), jnp.float32, -bound, bound),
        "gamma1": jax.random.uniform(k3, (cout,), jnp.float32, 0.5, 1.5),
        "beta1": 0.1 * jax.random.normal(k4, (cout,), jnp.float32),
        "gamma2": jax.random.uniform(k5, (cout,), jnp.float32, 0.5, 1.5),
        "beta2": 0.1 * jax.random.normal(k6, (cout,), jnp.float32),
    }
    x = jax.random.normal(kx, (N, in_channel, H, W), jnp.float32)

    out = jax.jit(conv_block_forward)(x, params)
    out = jax.block_until_ready(out)
    assert out.shape == (N, cout, H, W)

    # bf16 MXU operands + bf16 intermediate storage -> compare against the pure-f32
    # reference with a loose-but-meaningful tolerance (norm check + pointwise guard).
    ref = reference_forward(x, params)
    rel = jnp.linalg.norm(out - ref) / (jnp.linalg.norm(ref) + 1e-12)
    assert float(rel) < 3e-2, f"relative error too large: {float(rel)}"
    assert jnp.allclose(out, ref, rtol=1e-1, atol=1e-1), "mismatch vs. JAX reference"

    print("KERNEL_OK")
</pallas_src>

<mosaic_0001>
module attributes {stable_mosaic.version = 11 : i64} {
  func.func @conv_bn_kernel(%arg0: i32, %arg1: memref<2x8x8x64xf32, #tpu.memory_space<vmem>>, %arg2: memref<3x192x64xbf16, #tpu.memory_space<vmem>>, %arg3: memref<1x64xf32, #tpu.memory_space<vmem>>, %arg4: memref<1x64xf32, #tpu.memory_space<vmem>>, %arg5: memref<2x8x8x64xbf16, #tpu.memory_space<vmem>>, %arg6: memref<1x1x64xf32, #tpu.memory_space<vmem>>, %arg7: memref<1x1x64xf32, #tpu.memory_space<vmem>>, %arg8: memref<2x10x10x64xf32, #tpu.memory_space<vmem>>) attributes {dimension_semantics = [#tpu.dimension_semantics<parallel>], iteration_bounds = array<i64: 1>, scalar_prefetch = 0 : i64, scratch_operands = 1 : i64, tpu.core_type = #tpu.core_type<tc>, window_params = [{transform_indices = @transform_0, window_bounds = array<i64: 2, 8, 8, 64>}, {pipeline_mode = #tpu.pipeline_mode<synchronous>, transform_indices = @transform_1, window_bounds = array<i64: 3, 192, 64>}, {pipeline_mode = #tpu.pipeline_mode<synchronous>, transform_indices = @transform_2, window_bounds = array<i64: 1, 64>}, {pipeline_mode = #tpu.pipeline_mode<synchronous>, transform_indices = @transform_3, window_bounds = array<i64: 1, 64>}, {transform_indices = @transform_4, window_bounds = array<i64: 2, 8, 8, 64>}, {transform_indices = @transform_5, window_bounds = array<i64: 1, 1, 64>}, {transform_indices = @transform_6, window_bounds = array<i64: 1, 1, 64>}]} {
    %c0 = arith.constant 0 : index
    %c0_0 = arith.constant 0 : index
    %c0_1 = arith.constant 0 : index
    %c0_2 = arith.constant 0 : index
    %0 = vector.load %arg1[%c0, %c0_0, %c0_1, %c0_2] : memref<2x8x8x64xf32, #tpu.memory_space<vmem>>, vector<2x8x8x64xf32>
    %cst = arith.constant 0.000000e+00 : f32
    %1 = vector.broadcast %cst : f32 to vector<2x10x10x64xf32>
    %c0_3 = arith.constant 0 : index
    %c0_4 = arith.constant 0 : index
    %c0_5 = arith.constant 0 : index
    %c0_6 = arith.constant 0 : index
    %2 = vector.load %arg8[%c0_3, %c0_4, %c0_5, %c0_6] : memref<2x10x10x64xf32, #tpu.memory_space<vmem>>, vector<2x10x10x64xf32>
    tpu.vector_store %arg8[%c0_3, %c0_4, %c0_5, %c0_6], %1 {strides = array<i32>} : memref<2x10x10x64xf32, #tpu.memory_space<vmem>>, vector<2x10x10x64xf32>,
    %c0_7 = arith.constant 0 : index
    %c1 = arith.constant 1 : index
    %c1_8 = arith.constant 1 : index
    %c0_9 = arith.constant 0 : index
    %3 = vector.load %arg8[%c0_7, %c1, %c1_8, %c0_9] : memref<2x10x10x64xf32, #tpu.memory_space<vmem>>, vector<2x8x8x64xf32>
    tpu.vector_store %arg8[%c0_7, %c1, %c1_8, %c0_9], %0 {strides = array<i32>} : memref<2x10x10x64xf32, #tpu.memory_space<vmem>>, vector<2x8x8x64xf32>,
    %c0_10 = arith.constant 0 : index
    %c0_11 = arith.constant 0 : index
    %c0_12 = arith.constant 0 : index
    %c0_13 = arith.constant 0 : index
    %4 = vector.load %arg8[%c0_10, %c0_11, %c0_12, %c0_13] : memref<2x10x10x64xf32, #tpu.memory_space<vmem>>, vector<2x10x10x64xf32>
    %cst_14 = arith.constant 0.000000e+00 : f32
    %5 = vector.broadcast %cst_14 : f32 to vector<128x64xf32>
    %6 = vector.extract_strided_slice %4 {offsets = [0, 0, 0, 0], sizes = [2, 8, 10, 64], strides = [1, 1, 1, 1]} : vector<2x10x10x64xf32> to vector<2x8x10x64xf32>
    %7 = vector.extract_strided_slice %6 {offsets = [0, 0, 0, 0], sizes = [2, 8, 8, 64], strides = [1, 1, 1, 1]} : vector<2x8x10x64xf32> to vector<2x8x8x64xf32>
    %8 = vector.extract_strided_slice %6 {offsets = [0, 0, 1, 0], sizes = [2, 8, 8, 64], strides = [1, 1, 1, 1]} : vector<2x8x10x64xf32> to vector<2x8x8x64xf32>
    %9 = vector.extract_strided_slice %6 {offsets = [0, 0, 2, 0], sizes = [2, 8, 8, 64], strides = [1, 1, 1, 1]} : vector<2x8x10x64xf32> to vector<2x8x8x64xf32>
    %10 = tpu.concatenate %7, %8, %9 in 3 : vector<2x8x8x64xf32>, vector<2x8x8x64xf32>, vector<2x8x8x64xf32> -> vector<2x8x8x192xf32>
    %11 = vector.shape_cast %10 : vector<2x8x8x192xf32> to vector<128x192xf32>
    %12 = arith.truncf %11 : vector<128x192xf32> to vector<128x192xbf16>
    %c0_15 = arith.constant 0 : index
    %c0_16 = arith.constant 0 : index
    %c0_17 = arith.constant 0 : index
    %13 = vector.load %arg2[%c0_15, %c0_16, %c0_17] : memref<3x192x64xbf16, #tpu.memory_space<vmem>>, vector<1x192x64xbf16>
    %14 = vector.shape_cast %13 : vector<1x192x64xbf16> to vector<192x64xbf16>
    %cst_18 = arith.constant dense<0.000000e+00> : vector<128x64xf32>
    %15 = tpu.matmul %12, %14, %cst_18 {dimension_numbers = #tpu.dot_dimension_numbers<[1], [0], [0], [1], [0, 0, 1, 1], [], []>} : vector<128x192xbf16>, vector<192x64xbf16>, vector<128x64xf32> -> vector<128x64xf32>
    %16 = arith.addf %5, %15 : vector<128x64xf32>
    %17 = vector.extract_strided_slice %4 {offsets = [0, 1, 0, 0], sizes = [2, 8, 10, 64], strides = [1, 1, 1, 1]} : vector<2x10x10x64xf32> to vector<2x8x10x64xf32>
    %18 = vector.extract_strided_slice %17 {offsets = [0, 0, 0, 0], sizes = [2, 8, 8, 64], strides = [1, 1, 1, 1]} : vector<2x8x10x64xf32> to vector<2x8x8x64xf32>
    %19 = vector.extract_strided_slice %17 {offsets = [0, 0, 1, 0], sizes = [2, 8, 8, 64], strides = [1, 1, 1, 1]} : vector<2x8x10x64xf32> to vector<2x8x8x64xf32>
    %20 = vector.extract_strided_slice %17 {offsets = [0, 0, 2, 0], sizes = [2, 8, 8, 64], strides = [1, 1, 1, 1]} : vector<2x8x10x64xf32> to vector<2x8x8x64xf32>
    %21 = tpu.concatenate %18, %19, %20 in 3 : vector<2x8x8x64xf32>, vector<2x8x8x64xf32>, vector<2x8x8x64xf32> -> vector<2x8x8x192xf32>
    %22 = vector.shape_cast %21 : vector<2x8x8x192xf32> to vector<128x192xf32>
    %23 = arith.truncf %22 : vector<128x192xf32> to vector<128x192xbf16>
    %c1_19 = arith.constant 1 : index
    %c0_20 = arith.constant 0 : index
    %c0_21 = arith.constant 0 : index
    %24 = vector.load %arg2[%c1_19, %c0_20, %c0_21] : memref<3x192x64xbf16, #tpu.memory_space<vmem>>, vector<1x192x64xbf16>
    %25 = vector.shape_cast %24 : vector<1x192x64xbf16> to vector<192x64xbf16>
    %cst_22 = arith.constant dense<0.000000e+00> : vector<128x64xf32>
    %26 = tpu.matmul %23, %25, %cst_22 {dimension_numbers = #tpu.dot_dimension_numbers<[1], [0], [0], [1], [0, 0, 1, 1], [], []>} : vector<128x192xbf16>, vector<192x64xbf16>, vector<128x64xf32> -> vector<128x64xf32>
    %27 = arith.addf %16, %26 : vector<128x64xf32>
    %28 = vector.extract_strided_slice %4 {offsets = [0, 2, 0, 0], sizes = [2, 8, 10, 64], strides = [1, 1, 1, 1]} : vector<2x10x10x64xf32> to vector<2x8x10x64xf32>
    %29 = vector.extract_strided_slice %28 {offsets = [0, 0, 0, 0], sizes = [2, 8, 8, 64], strides = [1, 1, 1, 1]} : vector<2x8x10x64xf32> to vector<2x8x8x64xf32>
    %30 = vector.extract_strided_slice %28 {offsets = [0, 0, 1, 0], sizes = [2, 8, 8, 64], strides = [1, 1, 1, 1]} : vector<2x8x10x64xf32> to vector<2x8x8x64xf32>
    %31 = vector.extract_strided_slice %28 {offsets = [0, 0, 2, 0], sizes = [2, 8, 8, 64], strides = [1, 1, 1, 1]} : vector<2x8x10x64xf32> to vector<2x8x8x64xf32>
    %32 = tpu.concatenate %29, %30, %31 in 3 : vector<2x8x8x64xf32>, vector<2x8x8x64xf32>, vector<2x8x8x64xf32> -> vector<2x8x8x192xf32>
    %33 = vector.shape_cast %32 : vector<2x8x8x192xf32> to vector<128x192xf32>
    %34 = arith.truncf %33 : vector<128x192xf32> to vector<128x192xbf16>
    %c2 = arith.constant 2 : index
    %c0_23 = arith.constant 0 : index
    %c0_24 = arith.constant 0 : index
    %35 = vector.load %arg2[%c2, %c0_23, %c0_24] : memref<3x192x64xbf16, #tpu.memory_space<vmem>>, vector<1x192x64xbf16>
    %36 = vector.shape_cast %35 : vector<1x192x64xbf16> to vector<192x64xbf16>
    %cst_25 = arith.constant dense<0.000000e+00> : vector<128x64xf32>
    %37 = tpu.matmul %34, %36, %cst_25 {dimension_numbers = #tpu.dot_dimension_numbers<[1], [0], [0], [1], [0, 0, 1, 1], [], []>} : vector<128x192xbf16>, vector<192x64xbf16>, vector<128x64xf32> -> vector<128x64xf32>
    %38 = arith.addf %27, %37 : vector<128x64xf32>
    %39 = vector.shape_cast %38 : vector<128x64xf32> to vector<2x8x8x64xf32>
    %40 = arith.truncf %39 : vector<2x8x8x64xf32> to vector<2x8x8x64xbf16>
    %c0_26 = arith.constant 0 : index
    %c0_27 = arith.constant 0 : index
    %c0_28 = arith.constant 0 : index
    %c0_29 = arith.constant 0 : index
    %41 = vector.load %arg5[%c0_26, %c0_27, %c0_28, %c0_29] : memref<2x8x8x64xbf16, #tpu.memory_space<vmem>>, vector<2x8x8x64xbf16>
    tpu.vector_store %arg5[%c0_26, %c0_27, %c0_28, %c0_29], %40 {strides = array<i32>} : memref<2x8x8x64xbf16, #tpu.memory_space<vmem>>, vector<2x8x8x64xbf16>,
    %cst_30 = arith.constant dense<0.000000e+00> : vector<64xf32>
    %42 = vector.multi_reduction <add>, %38, %cst_30 [0] : vector<128x64xf32> to vector<64xf32>
    %43 = vector.shape_cast %42 : vector<64xf32> to vector<1x1x64xf32>
    %c0_31 = arith.constant 0 : index
    %c0_32 = arith.constant 0 : index
    %c0_33 = arith.constant 0 : index
    %44 = vector.load %arg6[%c0_31, %c0_32, %c0_33] : memref<1x1x64xf32, #tpu.memory_space<vmem>>, vector<1x1x64xf32>
    tpu.vector_store %arg6[%c0_31, %c0_32, %c0_33], %43 {strides = array<i32>} : memref<1x1x64xf32, #tpu.memory_space<vmem>>, vector<1x1x64xf32>,
    %45 = arith.mulf %38, %38 : vector<128x64xf32>
    %cst_34 = arith.constant dense<0.000000e+00> : vector<64xf32>
    %46 = vector.multi_reduction <add>, %45, %cst_34 [0] : vector<128x64xf32> to vector<64xf32>
    %47 = vector.shape_cast %46 : vector<64xf32> to vector<1x1x64xf32>
    %c0_35 = arith.constant 0 : index
    %c0_36 = arith.constant 0 : index
    %c0_37 = arith.constant 0 : index
    %48 = vector.load %arg7[%c0_35, %c0_36, %c0_37] : memref<1x1x64xf32, #tpu.memory_space<vmem>>, vector<1x1x64xf32>
    tpu.vector_store %arg7[%c0_35, %c0_36, %c0_37], %47 {strides = array<i32>} : memref<1x1x64xf32, #tpu.memory_space<vmem>>, vector<1x1x64xf32>,
    return
  }
  func.func @transform_0(%arg0: i32) -> (i32, i32, i32, i32) {
    %c0_i32 = arith.constant 0 : i32
    %c0_i32_0 = arith.constant 0 : i32
    %c0_i32_1 = arith.constant 0 : i32
    %c0_i32_2 = arith.constant 0 : i32
    return %arg0, %c0_i32, %c0_i32_0, %c0_i32_1 : i32, i32, i32, i32
  }
  func.func @transform_1(%arg0: i32) -> (i32, i32, i32) {
    %c0_i32 = arith.constant 0 : i32
    %c0_i32_0 = arith.constant 0 : i32
    %c0_i32_1 = arith.constant 0 : i32
    %c0_i32_2 = arith.constant 0 : i32
    return %c0_i32, %c0_i32_0, %c0_i32_1 : i32, i32, i32
  }
  func.func @transform_2(%arg0: i32) -> (i32, i32) {
    %c0_i32 = arith.constant 0 : i32
    %c0_i32_0 = arith.constant 0 : i32
    %c0_i32_1 = arith.constant 0 : i32
    return %c0_i32, %c0_i32_0 : i32, i32
  }
  func.func @transform_3(%arg0: i32) -> (i32, i32) {
    %c0_i32 = arith.constant 0 : i32
    %c0_i32_0 = arith.constant 0 : i32
    %c0_i32_1 = arith.constant 0 : i32
    return %c0_i32, %c0_i32_0 : i32, i32
  }
  func.func @transform_4(%arg0: i32) -> (i32, i32, i32, i32) {
    %c0_i32 = arith.constant 0 : i32
    %c0_i32_0 = arith.constant 0 : i32
    %c0_i32_1 = arith.constant 0 : i32
    %c0_i32_2 = arith.constant 0 : i32
    return %arg0, %c0_i32, %c0_i32_0, %c0_i32_1 : i32, i32, i32, i32
  }
  func.func @transform_5(%arg0: i32) -> (i32, i32, i32) {
    %c0_i32 = arith.constant 0 : i32
    %c0_i32_0 = arith.constant 0 : i32
    %c0_i32_1 = arith.constant 0 : i32
    return %arg0, %c0_i32, %c0_i32_0 : i32, i32, i32
  }
  func.func @transform_6(%arg0: i32) -> (i32, i32, i32) {
    %c0_i32 = arith.constant 0 : i32
    %c0_i32_0 = arith.constant 0 : i32
    %c0_i32_1 = arith.constant 0 : i32
    return %arg0, %c0_i32, %c0_i32_0 : i32, i32, i32
  }
}

module attributes {stable_mosaic.version = 11 : i64} {
  func.func @conv_bn_kernel(%arg0: i32, %arg1: memref<2x8x8x64xbf16, #tpu.memory_space<vmem>>, %arg2: memref<3x192x64xbf16, #tpu.memory_space<vmem>>, %arg3: memref<1x64xf32, #tpu.memory_space<vmem>>, %arg4: memref<1x64xf32, #tpu.memory_space<vmem>>, %arg5: memref<2x8x8x64xbf16, #tpu.memory_space<vmem>>, %arg6: memref<1x1x64xf32, #tpu.memory_space<vmem>>, %arg7: memref<1x1x64xf32, #tpu.memory_space<vmem>>, %arg8: memref<2x10x10x64xf32, #tpu.memory_space<vmem>>) attributes {dimension_semantics = [#tpu.dimension_semantics<parallel>], iteration_bounds = array<i64: 1>, scalar_prefetch = 0 : i64, scratch_operands = 1 : i64, tpu.core_type = #tpu.core_type<tc>, window_params = [{transform_indices = @transform_0, window_bounds = array<i64: 2, 8, 8, 64>}, {pipeline_mode = #tpu.pipeline_mode<synchronous>, transform_indices = @transform_1, window_bounds = array<i64: 3, 192, 64>}, {pipeline_mode = #tpu.pipeline_mode<synchronous>, transform_indices = @transform_2, window_bounds = array<i64: 1, 64>}, {pipeline_mode = #tpu.pipeline_mode<synchronous>, transform_indices = @transform_3, window_bounds = array<i64: 1, 64>}, {transform_indices = @transform_4, window_bounds = array<i64: 2, 8, 8, 64>}, {transform_indices = @transform_5, window_bounds = array<i64: 1, 1, 64>}, {transform_indices = @transform_6, window_bounds = array<i64: 1, 1, 64>}]} {
    %c0 = arith.constant 0 : index
    %c0_0 = arith.constant 0 : index
    %c0_1 = arith.constant 0 : index
    %c0_2 = arith.constant 0 : index
    %0 = vector.load %arg1[%c0, %c0_0, %c0_1, %c0_2] : memref<2x8x8x64xbf16, #tpu.memory_space<vmem>>, vector<2x8x8x64xbf16>
    %1 = arith.extf %0 : vector<2x8x8x64xbf16> to vector<2x8x8x64xf32>
    %c0_3 = arith.constant 0 : index
    %c0_4 = arith.constant 0 : index
    %2 = vector.load %arg3[%c0_3, %c0_4] : memref<1x64xf32, #tpu.memory_space<vmem>>, vector<1x64xf32>
    %3 = vector.shape_cast %2 : vector<1x64xf32> to vector<1x1x1x64xf32>
    %4 = vector.broadcast %3 : vector<1x1x1x64xf32> to vector<2x8x8x64xf32>
    %5 = arith.mulf %1, %4 : vector<2x8x8x64xf32>
    %c0_5 = arith.constant 0 : index
    %c0_6 = arith.constant 0 : index
    %6 = vector.load %arg4[%c0_5, %c0_6] : memref<1x64xf32, #tpu.memory_space<vmem>>, vector<1x64xf32>
    %7 = vector.shape_cast %6 : vector<1x64xf32> to vector<1x1x1x64xf32>
    %8 = vector.broadcast %7 : vector<1x1x1x64xf32> to vector<2x8x8x64xf32>
    %9 = arith.addf %5, %8 : vector<2x8x8x64xf32>
    %cst = arith.constant 0.000000e+00 : f32
    %10 = vector.broadcast %cst : f32 to vector<2x8x8x64xf32>
    %11 = arith.maximumf %9, %10 : vector<2x8x8x64xf32>
    %cst_7 = arith.constant 0.000000e+00 : f32
    %12 = vector.broadcast %cst_7 : f32 to vector<2x10x10x64xf32>
    %c0_8 = arith.constant 0 : index
    %c0_9 = arith.constant 0 : index
    %c0_10 = arith.constant 0 : index
    %c0_11 = arith.constant 0 : index
    %13 = vector.load %arg8[%c0_8, %c0_9, %c0_10, %c0_11] : memref<2x10x10x64xf32, #tpu.memory_space<vmem>>, vector<2x10x10x64xf32>
    tpu.vector_store %arg8[%c0_8, %c0_9, %c0_10, %c0_11], %12 {strides = array<i32>} : memref<2x10x10x64xf32, #tpu.memory_space<vmem>>, vector<2x10x10x64xf32>,
    %c0_12 = arith.constant 0 : index
    %c1 = arith.constant 1 : index
    %c1_13 = arith.constant 1 : index
    %c0_14 = arith.constant 0 : index
    %14 = vector.load %arg8[%c0_12, %c1, %c1_13, %c0_14] : memref<2x10x10x64xf32, #tpu.memory_space<vmem>>, vector<2x8x8x64xf32>
    tpu.vector_store %arg8[%c0_12, %c1, %c1_13, %c0_14], %11 {strides = array<i32>} : memref<2x10x10x64xf32, #tpu.memory_space<vmem>>, vector<2x8x8x64xf32>,
    %c0_15 = arith.constant 0 : index
    %c0_16 = arith.constant 0 : index
    %c0_17 = arith.constant 0 : index
    %c0_18 = arith.constant 0 : index
    %15 = vector.load %arg8[%c0_15, %c0_16, %c0_17, %c0_18] : memref<2x10x10x64xf32, #tpu.memory_space<vmem>>, vector<2x10x10x64xf32>
    %cst_19 = arith.constant 0.000000e+00 : f32
    %16 = vector.broadcast %cst_19 : f32 to vector<128x64xf32>
    %17 = vector.extract_strided_slice %15 {offsets = [0, 0, 0, 0], sizes = [2, 8, 10, 64], strides = [1, 1, 1, 1]} : vector<2x10x10x64xf32> to vector<2x8x10x64xf32>
    %18 = vector.extract_strided_slice %17 {offsets = [0, 0, 0, 0], sizes = [2, 8, 8, 64], strides = [1, 1, 1, 1]} : vector<2x8x10x64xf32> to vector<2x8x8x64xf32>
    %19 = vector.extract_strided_slice %17 {offsets = [0, 0, 1, 0], sizes = [2, 8, 8, 64], strides = [1, 1, 1, 1]} : vector<2x8x10x64xf32> to vector<2x8x8x64xf32>
    %20 = vector.extract_strided_slice %17 {offsets = [0, 0, 2, 0], sizes = [2, 8, 8, 64], strides = [1, 1, 1, 1]} : vector<2x8x10x64xf32> to vector<2x8x8x64xf32>
    %21 = tpu.concatenate %18, %19, %20 in 3 : vector<2x8x8x64xf32>, vector<2x8x8x64xf32>, vector<2x8x8x64xf32> -> vector<2x8x8x192xf32>
    %22 = vector.shape_cast %21 : vector<2x8x8x192xf32> to vector<128x192xf32>
    %23 = arith.truncf %22 : vector<128x192xf32> to vector<128x192xbf16>
    %c0_20 = arith.constant 0 : index
    %c0_21 = arith.constant 0 : index
    %c0_22 = arith.constant 0 : index
    %24 = vector.load %arg2[%c0_20, %c0_21, %c0_22] : memref<3x192x64xbf16, #tpu.memory_space<vmem>>, vector<1x192x64xbf16>
    %25 = vector.shape_cast %24 : vector<1x192x64xbf16> to vector<192x64xbf16>
    %cst_23 = arith.constant dense<0.000000e+00> : vector<128x64xf32>
    %26 = tpu.matmul %23, %25, %cst_23 {dimension_numbers = #tpu.dot_dimension_numbers<[1], [0], [0], [1], [0, 0, 1, 1], [], []>} : vector<128x192xbf16>, vector<192x64xbf16>, vector<128x64xf32> -> vector<128x64xf32>
    %27 = arith.addf %16, %26 : vector<128x64xf32>
    %28 = vector.extract_strided_slice %15 {offsets = [0, 1, 0, 0], sizes = [2, 8, 10, 64], strides = [1, 1, 1, 1]} : vector<2x10x10x64xf32> to vector<2x8x10x64xf32>
    %29 = vector.extract_strided_slice %28 {offsets = [0, 0, 0, 0], sizes = [2, 8, 8, 64], strides = [1, 1, 1, 1]} : vector<2x8x10x64xf32> to vector<2x8x8x64xf32>
    %30 = vector.extract_strided_slice %28 {offsets = [0, 0, 1, 0], sizes = [2, 8, 8, 64], strides = [1, 1, 1, 1]} : vector<2x8x10x64xf32> to vector<2x8x8x64xf32>
    %31 = vector.extract_strided_slice %28 {offsets = [0, 0, 2, 0], sizes = [2, 8, 8, 64], strides = [1, 1, 1, 1]} : vector<2x8x10x64xf32> to vector<2x8x8x64xf32>
    %32 = tpu.concatenate %29, %30, %31 in 3 : vector<2x8x8x64xf32>, vector<2x8x8x64xf32>, vector<2x8x8x64xf32> -> vector<2x8x8x192xf32>
    %33 = vector.shape_cast %32 : vector<2x8x8x192xf32> to vector<128x192xf32>
    %34 = arith.truncf %33 : vector<128x192xf32> to vector<128x192xbf16>
    %c1_24 = arith.constant 1 : index
    %c0_25 = arith.constant 0 : index
    %c0_26 = arith.constant 0 : index
    %35 = vector.load %arg2[%c1_24, %c0_25, %c0_26] : memref<3x192x64xbf16, #tpu.memory_space<vmem>>, vector<1x192x64xbf16>
    %36 = vector.shape_cast %35 : vector<1x192x64xbf16> to vector<192x64xbf16>
    %cst_27 = arith.constant dense<0.000000e+00> : vector<128x64xf32>
    %37 = tpu.matmul %34, %36, %cst_27 {dimension_numbers = #tpu.dot_dimension_numbers<[1], [0], [0], [1], [0, 0, 1, 1], [], []>} : vector<128x192xbf16>, vector<192x64xbf16>, vector<128x64xf32> -> vector<128x64xf32>
    %38 = arith.addf %27, %37 : vector<128x64xf32>
    %39 = vector.extract_strided_slice %15 {offsets = [0, 2, 0, 0], sizes = [2, 8, 10, 64], strides = [1, 1, 1, 1]} : vector<2x10x10x64xf32> to vector<2x8x10x64xf32>
    %40 = vector.extract_strided_slice %39 {offsets = [0, 0, 0, 0], sizes = [2, 8, 8, 64], strides = [1, 1, 1, 1]} : vector<2x8x10x64xf32> to vector<2x8x8x64xf32>
    %41 = vector.extract_strided_slice %39 {offsets = [0, 0, 1, 0], sizes = [2, 8, 8, 64], strides = [1, 1, 1, 1]} : vector<2x8x10x64xf32> to vector<2x8x8x64xf32>
    %42 = vector.extract_strided_slice %39 {offsets = [0, 0, 2, 0], sizes = [2, 8, 8, 64], strides = [1, 1, 1, 1]} : vector<2x8x10x64xf32> to vector<2x8x8x64xf32>
    %43 = tpu.concatenate %40, %41, %42 in 3 : vector<2x8x8x64xf32>, vector<2x8x8x64xf32>, vector<2x8x8x64xf32> -> vector<2x8x8x192xf32>
    %44 = vector.shape_cast %43 : vector<2x8x8x192xf32> to vector<128x192xf32>
    %45 = arith.truncf %44 : vector<128x192xf32> to vector<128x192xbf16>
    %c2 = arith.constant 2 : index
    %c0_28 = arith.constant 0 : index
    %c0_29 = arith.constant 0 : index
    %46 = vector.load %arg2[%c2, %c0_28, %c0_29] : memref<3x192x64xbf16, #tpu.memory_space<vmem>>, vector<1x192x64xbf16>
    %47 = vector.shape_cast %46 : vector<1x192x64xbf16> to vector<192x64xbf16>
    %cst_30 = arith.constant dense<0.000000e+00> : vector<128x64xf32>
    %48 = tpu.matmul %45, %47, %cst_30 {dimension_numbers = #tpu.dot_dimension_numbers<[1], [0], [0], [1], [0, 0, 1, 1], [], []>} : vector<128x192xbf16>, vector<192x64xbf16>, vector<128x64xf32> -> vector<128x64xf32>
    %49 = arith.addf %38, %48 : vector<128x64xf32>
    %50 = vector.shape_cast %49 : vector<128x64xf32> to vector<2x8x8x64xf32>
    %51 = arith.truncf %50 : vector<2x8x8x64xf32> to vector<2x8x8x64xbf16>
    %c0_31 = arith.constant 0 : index
    %c0_32 = arith.constant 0 : index
    %c0_33 = arith.constant 0 : index
    %c0_34 = arith.constant 0 : index
    %52 = vector.load %arg5[%c0_31, %c0_32, %c0_33, %c0_34] : memref<2x8x8x64xbf16, #tpu.memory_space<vmem>>, vector<2x8x8x64xbf16>
    tpu.vector_store %arg5[%c0_31, %c0_32, %c0_33, %c0_34], %51 {strides = array<i32>} : memref<2x8x8x64xbf16, #tpu.memory_space<vmem>>, vector<2x8x8x64xbf16>,
    %cst_35 = arith.constant dense<0.000000e+00> : vector<64xf32>
    %53 = vector.multi_reduction <add>, %49, %cst_35 [0] : vector<128x64xf32> to vector<64xf32>
    %54 = vector.shape_cast %53 : vector<64xf32> to vector<1x1x64xf32>
    %c0_36 = arith.constant 0 : index
    %c0_37 = arith.constant 0 : index
    %c0_38 = arith.constant 0 : index
    %55 = vector.load %arg6[%c0_36, %c0_37, %c0_38] : memref<1x1x64xf32, #tpu.memory_space<vmem>>, vector<1x1x64xf32>
    tpu.vector_store %arg6[%c0_36, %c0_37, %c0_38], %54 {strides = array<i32>} : memref<1x1x64xf32, #tpu.memory_space<vmem>>, vector<1x1x64xf32>,
    %56 = arith.mulf %49, %49 : vector<128x64xf32>
    %cst_39 = arith.constant dense<0.000000e+00> : vector<64xf32>
    %57 = vector.multi_reduction <add>, %56, %cst_39 [0] : vector<128x64xf32> to vector<64xf32>
    %58 = vector.shape_cast %57 : vector<64xf32> to vector<1x1x64xf32>
    %c0_40 = arith.constant 0 : index
    %c0_41 = arith.constant 0 : index
    %c0_42 = arith.constant 0 : index
    %59 = vector.load %arg7[%c0_40, %c0_41, %c0_42] : memref<1x1x64xf32, #tpu.memory_space<vmem>>, vector<1x1x64xf32>
    tpu.vector_store %arg7[%c0_40, %c0_41, %c0_42], %58 {strides = array<i32>} : memref<1x1x64xf32, #tpu.memory_space<vmem>>, vector<1x1x64xf32>,
    return
  }
  func.func @transform_0(%arg0: i32) -> (i32, i32, i32, i32) {
    %c0_i32 = arith.constant 0 : i32
    %c0_i32_0 = arith.constant 0 : i32
    %c0_i32_1 = arith.constant 0 : i32
    %c0_i32_2 = arith.constant 0 : i32
    return %arg0, %c0_i32, %c0_i32_0, %c0_i32_1 : i32, i32, i32, i32
  }
  func.func @transform_1(%arg0: i32) -> (i32, i32, i32) {
    %c0_i32 = arith.constant 0 : i32
    %c0_i32_0 = arith.constant 0 : i32
    %c0_i32_1 = arith.constant 0 : i32
    %c0_i32_2 = arith.constant 0 : i32
    return %c0_i32, %c0_i32_0, %c0_i32_1 : i32, i32, i32
  }
  func.func @transform_2(%arg0: i32) -> (i32, i32) {
    %c0_i32 = arith.constant 0 : i32
    %c0_i32_0 = arith.constant 0 : i32
    %c0_i32_1 = arith.constant 0 : i32
    return %c0_i32, %c0_i32_0 : i32, i32
  }
  func.func @transform_3(%arg0: i32) -> (i32, i32) {
    %c0_i32 = arith.constant 0 : i32
    %c0_i32_0 = arith.constant 0 : i32
    %c0_i32_1 = arith.constant 0 : i32
    return %c0_i32, %c0_i32_0 : i32, i32
  }
  func.func @transform_4(%arg0: i32) -> (i32, i32, i32, i32) {
    %c0_i32 = arith.constant 0 : i32
    %c0_i32_0 = arith.constant 0 : i32
    %c0_i32_1 = arith.constant 0 : i32
    %c0_i32_2 = arith.constant 0 : i32
    return %arg0, %c0_i32, %c0_i32_0, %c0_i32_1 : i32, i32, i32, i32
  }
  func.func @transform_5(%arg0: i32) -> (i32, i32, i32) {
    %c0_i32 = arith.constant 0 : i32
    %c0_i32_0 = arith.constant 0 : i32
    %c0_i32_1 = arith.constant 0 : i32
    return %arg0, %c0_i32, %c0_i32_0 : i32, i32, i32
  }
  func.func @transform_6(%arg0: i32) -> (i32, i32, i32) {
    %c0_i32 = arith.constant 0 : i32
    %c0_i32_0 = arith.constant 0 : i32
    %c0_i32_1 = arith.constant 0 : i32
    return %arg0, %c0_i32, %c0_i32_0 : i32, i32, i32
  }
}

module attributes {stable_mosaic.version = 11 : i64} {
  func.func @bn_relu_apply_kernel(%arg0: i32, %arg1: memref<64x128xbf16, #tpu.memory_space<vmem>>, %arg2: memref<1x128xf32, #tpu.memory_space<vmem>>, %arg3: memref<1x128xf32, #tpu.memory_space<vmem>>, %arg4: memref<64x128xf32, #tpu.memory_space<vmem>>) attributes {dimension_semantics = [#tpu.dimension_semantics<parallel>], iteration_bounds = array<i64: 1>, scalar_prefetch = 0 : i64, scratch_operands = 0 : i64, tpu.core_type = #tpu.core_type<tc>, window_params = [{transform_indices = @transform_0, window_bounds = array<i64: 64, 128>}, {pipeline_mode = #tpu.pipeline_mode<synchronous>, transform_indices = @transform_1, window_bounds = array<i64: 1, 128>}, {pipeline_mode = #tpu.pipeline_mode<synchronous>, transform_indices = @transform_2, window_bounds = array<i64: 1, 128>}, {transform_indices = @transform_3, window_bounds = array<i64: 64, 128>}]} {
    %c0 = arith.constant 0 : index
    %c0_0 = arith.constant 0 : index
    %0 = vector.load %arg1[%c0, %c0_0] : memref<64x128xbf16, #tpu.memory_space<vmem>>, vector<64x128xbf16>
    %1 = arith.extf %0 : vector<64x128xbf16> to vector<64x128xf32>
    %c0_1 = arith.constant 0 : index
    %c0_2 = arith.constant 0 : index
    %2 = vector.load %arg2[%c0_1, %c0_2] : memref<1x128xf32, #tpu.memory_space<vmem>>, vector<1x128xf32>
    %3 = vector.broadcast %2 : vector<1x128xf32> to vector<64x128xf32>
    %4 = arith.mulf %1, %3 : vector<64x128xf32>
    %c0_3 = arith.constant 0 : index
    %c0_4 = arith.constant 0 : index
    %5 = vector.load %arg3[%c0_3, %c0_4] : memref<1x128xf32, #tpu.memory_space<vmem>>, vector<1x128xf32>
    %6 = vector.broadcast %5 : vector<1x128xf32> to vector<64x128xf32>
    %7 = arith.addf %4, %6 : vector<64x128xf32>
    %cst = arith.constant 0.000000e+00 : f32
    %8 = vector.broadcast %cst : f32 to vector<64x128xf32>
    %9 = arith.maximumf %7, %8 : vector<64x128xf32>
    %c0_5 = arith.constant 0 : index
    %c0_6 = arith.constant 0 : index
    %10 = vector.load %arg4[%c0_5, %c0_6] : memref<64x128xf32, #tpu.memory_space<vmem>>, vector<64x128xf32>
    tpu.vector_store %arg4[%c0_5, %c0_6], %9 {strides = array<i32>} : memref<64x128xf32, #tpu.memory_space<vmem>>, vector<64x128xf32>,
    return
  }
  func.func @transform_0(%arg0: i32) -> (i32, i32) {
    %c0_i32 = arith.constant 0 : i32
    %c0_i32_0 = arith.constant 0 : i32
    return %arg0, %c0_i32 : i32, i32
  }
  func.func @transform_1(%arg0: i32) -> (i32, i32) {
    %c0_i32 = arith.constant 0 : i32
    %c0_i32_0 = arith.constant 0 : i32
    %c0_i32_1 = arith.constant 0 : i32
    return %c0_i32, %c0_i32_0 : i32, i32
  }
  func.func @transform_2(%arg0: i32) -> (i32, i32) {
    %c0_i32 = arith.constant 0 : i32
    %c0_i32_0 = arith.constant 0 : i32
    %c0_i32_1 = arith.constant 0 : i32
    return %c0_i32, %c0_i32_0 : i32, i32
  }
  func.func @transform_3(%arg0: i32) -> (i32, i32) {
    %c0_i32 = arith.constant 0 : i32
    %c0_i32_0 = arith.constant 0 : i32
    return %arg0, %c0_i32 : i32, i32
  }
}

</mosaic_0001>

<llo_original>
// kernel: tile.18
$region0: #{tile.18}
  #allocation0 [shape = 's32[1]{0}', space=sflag, size = 0x4, scoped, tag = 'scoped memory for tile.18']
  %s0 = inlined_call_operand.vmem [shape: f32[64], index: 0, kind: input, shape index: {}]
  %s1 = inlined_call_operand.vmem [shape: f32[2,64], index: 1, kind: output, shape index: {}]
  // Predicated region
  $region2: #{tile.18} parent=0 // pred_check
    _
  $region3: #{tile.18} parent=0 // pred_check_branch
    %3 = sbr.rel (0) target = $region5
  $region4: #{tile.18} parent=0 // pred_region
    _
  $region5: #{tile.18} parent=0 // pred_fallthru
    _
  %v4 = vld [vmem:[%s0] ss:$0 sm:$0xff]
  %5 = vst [vmem:[%s1] sm:$0x3] %v4

// kernel: tile.19
$region0: #{tile.19}
  %s0 = inlined_call_operand.vmem [shape: f32[2,64], index: 0, kind: input, shape index: {}]
  %s1 = inlined_call_operand.vmem [shape: f32[1,128], index: 1, kind: output, shape index: {}]
  $region1: #{tile.19} parent=0
    #allocation0 [shape = 'u8[4096]{0}', space=vmem, size = 0x1000, scoped, tag = 'scoped mem for output reshape']
    #allocation1 [shape = 'u8[4096]{0}', space=vmem, size = 0x1000, scoped, tag = 'scoped mem for input reshape']
    %s3 = sshllo.u32 0, 2
    %v4 = vld [vmem:[%s0] sm:%s3]
    %5 = vst [vmem:[#allocation1] sm:%s3] %v4
    %v6 = vld [vmem:[#allocation1] sm:$0x1]
    %vm7 = vcmask 523264
    %8 = vst.msk [vmem:[#allocation0] sm:$0x1] %vm7, %v6
    %s9 = scalar_lea.vmem [#allocation1], 1
    %v10 = vld [vmem:[%s9] sm:$0x1]
    %11 = vrot.lane.b32.xlu0 %v10, 64
    %v12 = vpop.permute.xlu0 %11
    %vm13 = vcmask 1048064
    %14 = vst.msk [vmem:[#allocation0] sm:$0x1] %vm13, %v12
    %s16 = sshllo.u32 0, 1
    %v18 = vld [vmem:[#allocation0] sm:%s16]
    %s19 = sshllo.u32 0, 1
    %20 = vst [vmem:[%s1] sm:%s19] %v18

// kernel: conv_block_forward.5
$region0: #{conv_block_forward.5}
  #allocation0 [shape = 'u32[]', space=smem, size = 0x4, offset = 0x4, fixed_abs, tag = 'smem constant byte address 0x4 - core index']
  #allocation1 [shape = 'u32[144,128]{1,0:T(1,128)}', space=vmem, size = 0x12000, scoped, tag = 'internal scratch']
  %s0 = inlined_call_operand.vmem [shape: bf16[64,128], index: 0, kind: input, shape index: {}]
  %s1 = inlined_call_operand.vmem [shape: f32[1,128], index: 1, kind: input, shape index: {}]
  %s2 = inlined_call_operand.vmem [shape: f32[1,128], index: 2, kind: input, shape index: {}]
  %s3 = inlined_call_operand.vmem [shape: f32[64,128], index: 3, kind: output, shape index: {}]
  %s4 = sld [smem:[#allocation0]]
  $region22: #{conv_block_forward.5} parent=0
    _
  %s6 = ssub.s32 1, %s4
  %s7 = scalar_select 0, %s6, %s4
  // Predicated region
  $region2: #{conv_block_forward.5} parent=0 // pred_check
    _
  $region3: #{conv_block_forward.5} parent=0 // pred_check_branch
    %9 = sbr.rel (0) target = $region5
  $region4: #{conv_block_forward.5} parent=0 // pred_region
    _
  $region5: #{conv_block_forward.5} parent=0 // pred_fallthru
    _
  // Predicated region
  $region6: #{conv_block_forward.5} parent=0 // pred_check
    _
  $region7: #{conv_block_forward.5} parent=0 // pred_check_branch
    %11 = sbr.rel (0) target = $region9
  $region8: #{conv_block_forward.5} parent=0 // pred_region
    _
  $region9: #{conv_block_forward.5} parent=0 // pred_fallthru
    _
  // Predicated region
  $region10: #{conv_block_forward.5} parent=0 // pred_check
    _
  $region11: #{conv_block_forward.5} parent=0 // pred_check_branch
    %13 = sbr.rel (0) target = $region13
  $region12: #{conv_block_forward.5} parent=0 // pred_region
    _
  $region13: #{conv_block_forward.5} parent=0 // pred_fallthru
    _
  %v14 = vld [vmem:[%s0] sm:$0xf]
  %v15 = vld [vmem:[%s0 + $0x4] sm:$0xf]
  %v16 = vld [vmem:[%s0 + $0x8] sm:$0xf]
  %v17 = vld [vmem:[%s0 + $0xc] sm:$0xf]
  %v18 = vld [vmem:[%s0 + $0x10] sm:$0xf]
  %v19 = vld [vmem:[%s0 + $0x14] sm:$0xf]
  %v20 = vld [vmem:[%s0 + $0x18] sm:$0xf]
  %v21 = vld [vmem:[%s0 + $0x1c] sm:$0xf]
  %v22 = vunpack.c.l.bf16 %v14
  %v23 = vunpack.c.l.bf16 %v15
  %v24 = vunpack.c.l.bf16 %v16
  %v25 = vunpack.c.l.bf16 %v17
  %v26 = vunpack.c.l.bf16 %v18
  %v27 = vunpack.c.l.bf16 %v19
  %v28 = vunpack.c.l.bf16 %v20
  %v29 = vunpack.c.l.bf16 %v21
  %v30 = vld [vmem:[%s1] sm:$0x1]
  %v32 = vlaneseq
  %v33 = vshrl.u32 %v32, 7
  %v34 = vsub.s32 0, %v33
  %v35 = vrot.slane %v30, %v34
  %v37 = vmul.f32 %v22, %v35
  %v38 = vmul.f32 %v23, %v35
  %v39 = vmul.f32 %v24, %v35
  %v40 = vmul.f32 %v25, %v35
  %v41 = vmul.f32 %v26, %v35
  %v42 = vmul.f32 %v27, %v35
  %v43 = vmul.f32 %v28, %v35
  %v44 = vmul.f32 %v29, %v35
  %v45 = vld [vmem:[%s2] sm:$0x1]
  %v47 = vlaneseq
  %v48 = vshrl.u32 %v47, 7
  %v49 = vsub.s32 0, %v48
  %v50 = vrot.slane %v45, %v49
  %v52 = vadd.f32 %v37, %v50
  %v53 = vadd.f32 %v38, %v50
  %v54 = vadd.f32 %v39, %v50
  %v55 = vadd.f32 %v40, %v50
  %v56 = vadd.f32 %v41, %v50
  %v57 = vadd.f32 %v42, %v50
  %v58 = vadd.f32 %v43, %v50
  %v59 = vadd.f32 %v44, %v50
  %v60 = vmax.f32 %v52, 0.0
  %v61 = vmax.f32 %v53, 0.0
  %v62 = vmax.f32 %v54, 0.0
  %v63 = vmax.f32 %v55, 0.0
  %v64 = vmax.f32 %v56, 0.0
  %v65 = vmax.f32 %v57, 0.0
  %v66 = vmax.f32 %v58, 0.0
  %v67 = vmax.f32 %v59, 0.0
  %68 = vst [vmem:[%s3] sm:$0xff] %v60
  %69 = vst [vmem:[%s3 + $0x8] sm:$0xff] %v61
  %70 = vst [vmem:[%s3 + $0x10] sm:$0xff] %v62
  %71 = vst [vmem:[%s3 + $0x18] sm:$0xff] %v63
  %72 = vst [vmem:[%s3 + $0x20] sm:$0xff] %v64
  %73 = vst [vmem:[%s3 + $0x28] sm:$0xff] %v65
  %74 = vst [vmem:[%s3 + $0x30] sm:$0xff] %v66
  %75 = vst [vmem:[%s3 + $0x38] sm:$0xff] %v67
  // Predicated region
  $region14: #{conv_block_forward.5} parent=0 // pred_check
    _
  $region15: #{conv_block_forward.5} parent=0 // pred_check_branch
    %77 = sbr.rel (0) target = $region17
  $region16: #{conv_block_forward.5} parent=0 // pred_region
    _
  $region17: #{conv_block_forward.5} parent=0 // pred_fallthru
    _
  // Predicated region
  $region18: #{conv_block_forward.5} parent=0 // pred_check
    _
  $region19: #{conv_block_forward.5} parent=0 // pred_check_branch
    %79 = sbr.rel (0) target = $region21
  $region20: #{conv_block_forward.5} parent=0 // pred_region
    _
  $region21: #{conv_block_forward.5} parent=0 // pred_fallthru
    _

// kernel: conv_block_forward.4
$region0: #{conv_block_forward.4}
  #allocation0 [shape = 'u32[]', space=smem, size = 0x4, offset = 0x4, fixed_abs, tag = 'smem constant byte address 0x4 - core index']
  #allocation1 [shape = 'u32[144,128]{1,0:T(1,128)}', space=vmem, size = 0x12000, scoped, tag = 'internal scratch']
  #allocation2 [shape = 'f32[2,10,10,64]{3,2,1,0:T(8,128)}', space=vmem, size = 0x28000, scoped, tag = 'scratch operand']
  %s0 = inlined_call_operand.vmem [shape: bf16[2,8,8,64], index: 0, kind: input, shape index: {}]
  %s1 = inlined_call_operand.vmem [shape: bf16[3,192,64], index: 1, kind: input, shape index: {}]
  %s2 = inlined_call_operand.vmem [shape: f32[1,64], index: 2, kind: input, shape index: {}]
  %s3 = inlined_call_operand.vmem [shape: f32[1,64], index: 3, kind: input, shape index: {}]
  %s4 = inlined_call_operand.vmem [shape: bf16[2,8,8,64], index: 4, kind: output, shape index: {0}]
  %s5 = inlined_call_operand.vmem [shape: f32[1,1,64], index: 5, kind: output, shape index: {1}]
  %s6 = inlined_call_operand.vmem [shape: f32[1,1,64], index: 6, kind: output, shape index: {2}]
  %7 = xla_tuple %s4, %s5, %s6
  %s8 = sld [smem:[#allocation0]]
  $region42: #{conv_block_forward.4} parent=0
    _
  %s10 = ssub.s32 1, %s8
  %s11 = scalar_select 0, %s10, %s8
  // Predicated region
  $region2: #{conv_block_forward.4} parent=0 // pred_check
    _
  $region3: #{conv_block_forward.4} parent=0 // pred_check_branch
    %13 = sbr.rel (0) target = $region5
  $region4: #{conv_block_forward.4} parent=0 // pred_region
    _
  $region5: #{conv_block_forward.4} parent=0 // pred_fallthru
    _
  // Predicated region
  $region6: #{conv_block_forward.4} parent=0 // pred_check
    _
  $region7: #{conv_block_forward.4} parent=0 // pred_check_branch
    %15 = sbr.rel (0) target = $region9
  $region8: #{conv_block_forward.4} parent=0 // pred_region
    _
  $region9: #{conv_block_forward.4} parent=0 // pred_fallthru
    _
  // Predicated region
  $region10: #{conv_block_forward.4} parent=0 // pred_check
    _
  $region11: #{conv_block_forward.4} parent=0 // pred_check_branch
    %17 = sbr.rel (0) target = $region13
  $region12: #{conv_block_forward.4} parent=0 // pred_region
    _
  $region13: #{conv_block_forward.4} parent=0 // pred_fallthru
    _
  // Predicated region
  $region14: #{conv_block_forward.4} parent=0 // pred_check
    _
  $region15: #{conv_block_forward.4} parent=0 // pred_check_branch
    %19 = sbr.rel (0) target = $region17
  $region16: #{conv_block_forward.4} parent=0 // pred_region
    _
  $region17: #{conv_block_forward.4} parent=0 // pred_fallthru
    _
  %v21 = vld [vmem:[%s0] sm:$0xf]
  %v22 = vld [vmem:[%s0 + $0x4] sm:$0xf]
  %v23 = vld [vmem:[%s0 + $0x8] sm:$0xf]
  %v24 = vld [vmem:[%s0 + $0xc] sm:$0xf]
  %v25 = vld [vmem:[%s0 + $0x10] sm:$0xf]
  %v26 = vld [vmem:[%s0 + $0x14] sm:$0xf]
  %v27 = vld [vmem:[%s0 + $0x18] sm:$0xf]
  %v28 = vld [vmem:[%s0 + $0x1c] sm:$0xf]
  %v29 = vld [vmem:[%s0 + $0x20] sm:$0xf]
  %v30 = vld [vmem:[%s0 + $0x24] sm:$0xf]
  %v31 = vld [vmem:[%s0 + $0x28] sm:$0xf]
  %v32 = vld [vmem:[%s0 + $0x2c] sm:$0xf]
  %v33 = vld [vmem:[%s0 + $0x30] sm:$0xf]
  %v34 = vld [vmem:[%s0 + $0x34] sm:$0xf]
  %v35 = vld [vmem:[%s0 + $0x38] sm:$0xf]
  %v36 = vld [vmem:[%s0 + $0x3c] sm:$0xf]
  %v37 = vunpack.c.l.bf16 %v21
  %v38 = vunpack.c.l.bf16 %v22
  %v39 = vunpack.c.l.bf16 %v23
  %v40 = vunpack.c.l.bf16 %v24
  %v41 = vunpack.c.l.bf16 %v25
  %v42 = vunpack.c.l.bf16 %v26
  %v43 = vunpack.c.l.bf16 %v27
  %v44 = vunpack.c.l.bf16 %v28
  %v45 = vunpack.c.l.bf16 %v29
  %v46 = vunpack.c.l.bf16 %v30
  %v47 = vunpack.c.l.bf16 %v31
  %v48 = vunpack.c.l.bf16 %v32
  %v49 = vunpack.c.l.bf16 %v33
  %v50 = vunpack.c.l.bf16 %v34
  %v51 = vunpack.c.l.bf16 %v35
  %v52 = vunpack.c.l.bf16 %v36
  %v53 = vld [vmem:[%s2] sm:$0x1]
  %v55 = vlaneseq
  %v56 = vshrl.u32 %v55, 7
  %v57 = vsub.s32 0, %v56
  %v58 = vrot.slane %v53, %v57
  %v60 = vmul.f32 %v37, %v58
  %v61 = vmul.f32 %v38, %v58
  %v62 = vmul.f32 %v39, %v58
  %v63 = vmul.f32 %v40, %v58
  %v64 = vmul.f32 %v41, %v58
  %v65 = vmul.f32 %v42, %v58
  %v66 = vmul.f32 %v43, %v58
  %v67 = vmul.f32 %v44, %v58
  %v68 = vmul.f32 %v45, %v58
  %v69 = vmul.f32 %v46, %v58
  %v70 = vmul.f32 %v47, %v58
  %v71 = vmul.f32 %v48, %v58
  %v72 = vmul.f32 %v49, %v58
  %v73 = vmul.f32 %v50, %v58
  %v74 = vmul.f32 %v51, %v58
  %v75 = vmul.f32 %v52, %v58
  %v76 = vld [vmem:[%s3] sm:$0x1]
  %v78 = vlaneseq
  %v79 = vshrl.u32 %v78, 7
  %v80 = vsub.s32 0, %v79
  %v81 = vrot.slane %v76, %v80
  %v83 = vadd.f32 %v60, %v81
  %v84 = vadd.f32 %v61, %v81
  %v85 = vadd.f32 %v62, %v81
  %v86 = vadd.f32 %v63, %v81
  %v87 = vadd.f32 %v64, %v81
  %v88 = vadd.f32 %v65, %v81
  %v89 = vadd.f32 %v66, %v81
  %v90 = vadd.f32 %v67, %v81
  %v91 = vadd.f32 %v68, %v81
  %v92 = vadd.f32 %v69, %v81
  %v93 = vadd.f32 %v70, %v81
  %v94 = vadd.f32 %v71, %v81
  %v95 = vadd.f32 %v72, %v81
  %v96 = vadd.f32 %v73, %v81
  %v97 = vadd.f32 %v74, %v81
  %v98 = vadd.f32 %v75, %v81
  %v99 = vmax.f32 %v83, 0.0
  %v100 = vmax.f32 %v84, 0.0
  %v101 = vmax.f32 %v85, 0.0
  %v102 = vmax.f32 %v86, 0.0
  %v103 = vmax.f32 %v87, 0.0
  %v104 = vmax.f32 %v88, 0.0
  %v105 = vmax.f32 %v89, 0.0
  %v106 = vmax.f32 %v90, 0.0
  %v107 = vmax.f32 %v91, 0.0
  %v108 = vmax.f32 %v92, 0.0
  %v109 = vmax.f32 %v93, 0.0
  %v110 = vmax.f32 %v94, 0.0
  %v111 = vmax.f32 %v95, 0.0
  %v112 = vmax.f32 %v96, 0.0
  %v113 = vmax.f32 %v97, 0.0
  %v114 = vmax.f32 %v98, 0.0
  %vm115 = vcmask 523264
  %116 = vst.msk [vmem:[#allocation2] sm:$0xff] %vm115, 0.0
  %vm117 = vcmask 517120
  %118 = vst.msk [vmem:[#allocation2 + $0x8] sm:$0x3] %vm117, 0.0
  %119 = vst.msk [vmem:[#allocation2 + $0x10] sm:$0xff] %vm115, 0.0
  %120 = vst.msk [vmem:[#allocation2 + $0x18] sm:$0x3] %vm117, 0.0
  %121 = vst.msk [vmem:[#allocation2 + $0x20] sm:$0xff] %vm115, 0.0
  %122 = vst.msk [vmem:[#allocation2 + $0x28] sm:$0x3] %vm117, 0.0
  %123 = vst.msk [vmem:[#allocation2 + $0x30] sm:$0xff] %vm115, 0.0
  %124 = vst.msk [vmem:[#allocation2 + $0x38] sm:$0x3] %vm117, 0.0
  %125 = vst.msk [vmem:[#allocation2 + $0x40] sm:$0xff] %vm115, 0.0
  %126 = vst.msk [vmem:[#allocation2 + $0x48] sm:$0x3] %vm117, 0.0
  %127 = vst.msk [vmem:[#allocation2 + $0x50] sm:$0xff] %vm115, 0.0
  %128 = vst.msk [vmem:[#allocation2 + $0x58] sm:$0x3] %vm117, 0.0
  %129 = vst.msk [vmem:[#allocation2 + $0x60] sm:$0xff] %vm115, 0.0
  %130 = vst.msk [vmem:[#allocation2 + $0x68] sm:$0x3] %vm117, 0.0
  %131 = vst.msk [vmem:[#allocation2 + $0x70] sm:$0xff] %vm115, 0.0
  %132 = vst.msk [vmem:[#allocation2 + $0x78] sm:$0x3] %vm117, 0.0
  %133 = vst.msk [vmem:[#allocation2 + $0x80] sm:$0xff] %vm115, 0.0
  %134 = vst.msk [vmem:[#allocation2 + $0x88] sm:$0x3] %vm117, 0.0
  %135 = vst.msk [vmem:[#allocation2 + $0x90] sm:$0xff] %vm115, 0.0
  %136 = vst.msk [vmem:[#allocation2 + $0x98] sm:$0x3] %vm117, 0.0
  %137 = vst.msk [vmem:[#allocation2 + $0xa0] sm:$0xff] %vm115, 0.0
  %138 = vst.msk [vmem:[#allocation2 + $0xa8] sm:$0x3] %vm117, 0.0
  %139 = vst.msk [vmem:[#allocation2 + $0xb0] sm:$0xff] %vm115, 0.0
  %140 = vst.msk [vmem:[#allocation2 + $0xb8] sm:$0x3] %vm117, 0.0
  %141 = vst.msk [vmem:[#allocation2 + $0xc0] sm:$0xff] %vm115, 0.0
  %142 = vst.msk [vmem:[#allocation2 + $0xc8] sm:$0x3] %vm117, 0.0
  %143 = vst.msk [vmem:[#allocation2 + $0xd0] sm:$0xff] %vm115, 0.0
  %144 = vst.msk [vmem:[#allocation2 + $0xd8] sm:$0x3] %vm117, 0.0
  %145 = vst.msk [vmem:[#allocation2 + $0xe0] sm:$0xff] %vm115, 0.0
  %146 = vst.msk [vmem:[#allocation2 + $0xe8] sm:$0x3] %vm117, 0.0
  %147 = vst.msk [vmem:[#allocation2 + $0xf0] sm:$0xff] %vm115, 0.0
  %148 = vst.msk [vmem:[#allocation2 + $0xf8] sm:$0x3] %vm117, 0.0
  %149 = vst.msk [vmem:[#allocation2 + $0x100] sm:$0xff] %vm115, 0.0
  %150 = vst.msk [vmem:[#allocation2 + $0x108] sm:$0x3] %vm117, 0.0
  %151 = vst.msk [vmem:[#allocation2 + $0x110] sm:$0xff] %vm115, 0.0
  %152 = vst.msk [vmem:[#allocation2 + $0x118] sm:$0x3] %vm117, 0.0
  %153 = vst.msk [vmem:[#allocation2 + $0x120] sm:$0xff] %vm115, 0.0
  %154 = vst.msk [vmem:[#allocation2 + $0x128] sm:$0x3] %vm117, 0.0
  %155 = vst.msk [vmem:[#allocation2 + $0x130] sm:$0xff] %vm115, 0.0
  %156 = vst.msk [vmem:[#allocation2 + $0x138] sm:$0x3] %vm117, 0.0
  %s157 = scalar_lea.vmem [#allocation2], 16
  %158 = vst.msk [vmem:[%s157 + $0x1] sm:$0xff] %vm115, %v99
  %159 = vst.msk [vmem:[%s157 + $0x11] sm:$0xff] %vm115, %v100
  %160 = vst.msk [vmem:[%s157 + $0x21] sm:$0xff] %vm115, %v101
  %161 = vst.msk [vmem:[%s157 + $0x31] sm:$0xff] %vm115, %v102
  %162 = vst.msk [vmem:[%s157 + $0x41] sm:$0xff] %vm115, %v103
  %163 = vst.msk [vmem:[%s157 + $0x51] sm:$0xff] %vm115, %v104
  %164 = vst.msk [vmem:[%s157 + $0x61] sm:$0xff] %vm115, %v105
  %165 = vst.msk [vmem:[%s157 + $0x71] sm:$0xff] %vm115, %v106
  %166 = vst.msk [vmem:[%s157 + $0xa1] sm:$0xff] %vm115, %v107
  %167 = vst.msk [vmem:[%s157 + $0xb1] sm:$0xff] %vm115, %v108
  %168 = vst.msk [vmem:[%s157 + $0xc1] sm:$0xff] %vm115, %v109
  %169 = vst.msk [vmem:[%s157 + $0xd1] sm:$0xff] %vm115, %v110
  %170 = vst.msk [vmem:[%s157 + $0xe1] sm:$0xff] %vm115, %v111
  %171 = vst.msk [vmem:[%s157 + $0xf1] sm:$0xff] %vm115, %v112
  %172 = vst.msk [vmem:[%s157 + $0x101] sm:$0xff] %vm115, %v113
  %173 = vst.msk [vmem:[%s157 + $0x111] sm:$0xff] %vm115, %v114
  %v174 = vld [vmem:[#allocation2] sm:$0xff]
  %v175 = vld [vmem:[#allocation2 + $0x8] sm:$0x3]
  %v176 = vld [vmem:[#allocation2 + $0x10] sm:$0xff]
  %v177 = vld [vmem:[#allocation2 + $0x18] sm:$0x3]
  %v178 = vld [vmem:[#allocation2 + $0x20] sm:$0xff]
  %v179 = vld [vmem:[#allocation2 + $0x28] sm:$0x3]
  %v180 = vld [vmem:[#allocation2 + $0x30] sm:$0xff]
  %v181 = vld [vmem:[#allocation2 + $0x38] sm:$0x3]
  %v182 = vld [vmem:[#allocation2 + $0x40] sm:$0xff]
  %v183 = vld [vmem:[#allocation2 + $0x48] sm:$0x3]
  %v184 = vld [vmem:[#allocation2 + $0x50] sm:$0xff]
  %v185 = vld [vmem:[#allocation2 + $0x58] sm:$0x3]
  %v186 = vld [vmem:[#allocation2 + $0x60] sm:$0xff]
  %v187 = vld [vmem:[#allocation2 + $0x68] sm:$0x3]
  %v188 = vld [vmem:[#allocation2 + $0x70] sm:$0xff]
  %v189 = vld [vmem:[#allocation2 + $0x78] sm:$0x3]
  %v190 = vld [vmem:[#allocation2 + $0x80] sm:$0xff]
  %v191 = vld [vmem:[#allocation2 + $0x88] sm:$0x3]
  %v192 = vld [vmem:[#allocation2 + $0x90] sm:$0xff]
  %v193 = vld [vmem:[#allocation2 + $0x98] sm:$0x3]
  %v194 = vld [vmem:[#allocation2 + $0xa0] sm:$0xff]
  %v195 = vld [vmem:[#allocation2 + $0xa8] sm:$0x3]
  %v196 = vld [vmem:[#allocation2 + $0xb0] sm:$0xff]
  %v197 = vld [vmem:[#allocation2 + $0xb8] sm:$0x3]
  %v198 = vld [vmem:[#allocation2 + $0xc0] sm:$0xff]
  %v199 = vld [vmem:[#allocation2 + $0xc8] sm:$0x3]
  %v200 = vld [vmem:[#allocation2 + $0xd0] sm:$0xff]
  %v201 = vld [vmem:[#allocation2 + $0xd8] sm:$0x3]
  %v202 = vld [vmem:[#allocation2 + $0xe0] sm:$0xff]
  %v203 = vld [vmem:[#allocation2 + $0xe8] sm:$0x3]
  %v204 = vld [vmem:[#allocation2 + $0xf0] sm:$0xff]
  %v205 = vld [vmem:[#allocation2 + $0xf8] sm:$0x3]
  %v206 = vld [vmem:[#allocation2 + $0x100] sm:$0xff]
  %v207 = vld [vmem:[#allocation2 + $0x108] sm:$0x3]
  %v208 = vld [vmem:[#allocation2 + $0x110] sm:$0xff]
  %v209 = vld [vmem:[#allocation2 + $0x118] sm:$0x3]
  %v210 = vld [vmem:[#allocation2 + $0x120] sm:$0xff]
  %v211 = vld [vmem:[#allocation2 + $0x128] sm:$0x3]
  %v212 = vld [vmem:[#allocation2 + $0x130] sm:$0xff]
  %v213 = vld [vmem:[#allocation2 + $0x138] sm:$0x3]
  %vm246 = vcmask 1046528
  %v247 = vrot.slane %v174, 1
  %v248 = vrot.slane %v175, 1
  %v249 = vsel %vm246, %v247, %v248
  %v250 = vrot.slane %v176, 1
  %v251 = vrot.slane %v177, 1
  %v252 = vsel %vm246, %v250, %v251
  %v253 = vrot.slane %v178, 1
  %v254 = vrot.slane %v179, 1
  %v255 = vsel %vm246, %v253, %v254
  %v256 = vrot.slane %v180, 1
  %v257 = vrot.slane %v181, 1
  %v258 = vsel %vm246, %v256, %v257
  %v259 = vrot.slane %v182, 1
  %v260 = vrot.slane %v183, 1
  %v261 = vsel %vm246, %v259, %v260
  %v262 = vrot.slane %v184, 1
  %v263 = vrot.slane %v185, 1
  %v264 = vsel %vm246, %v262, %v263
  %v265 = vrot.slane %v186, 1
  %v266 = vrot.slane %v187, 1
  %v267 = vsel %vm246, %v265, %v266
  %v268 = vrot.slane %v188, 1
  %v269 = vrot.slane %v189, 1
  %v270 = vsel %vm246, %v268, %v269
  %v271 = vrot.slane %v194, 1
  %v272 = vrot.slane %v195, 1
  %v273 = vsel %vm246, %v271, %v272
  %v274 = vrot.slane %v196, 1
  %v275 = vrot.slane %v197, 1
  %v276 = vsel %vm246, %v274, %v275
  %v277 = vrot.slane %v198, 1
  %v278 = vrot.slane %v199, 1
  %v279 = vsel %vm246, %v277, %v278
  %v280 = vrot.slane %v200, 1
  %v281 = vrot.slane %v201, 1
  %v282 = vsel %vm246, %v280, %v281
  %v283 = vrot.slane %v202, 1
  %v284 = vrot.slane %v203, 1
  %v285 = vsel %vm246, %v283, %v284
  %v286 = vrot.slane %v204, 1
  %v287 = vrot.slane %v205, 1
  %v288 = vsel %vm246, %v286, %v287
  %v289 = vrot.slane %v206, 1
  %v290 = vrot.slane %v207, 1
  %v291 = vsel %vm246, %v289, %v290
  %v292 = vrot.slane %v208, 1
  %v293 = vrot.slane %v209, 1
  %v294 = vsel %vm246, %v292, %v293
  %295 = vrot.lane.b32.xlu0 %v249, 64
  %v296 = vpop.permute.xlu0 %295
  %297 = vrot.lane.b32.xlu0 %v252, 64
  %v298 = vpop.permute.xlu0 %297
  %299 = vrot.lane.b32.xlu0 %v255, 64
  %v300 = vpop.permute.xlu0 %299
  %301 = vrot.lane.b32.xlu0 %v258, 64
  %v302 = vpop.permute.xlu0 %301
  %303 = vrot.lane.b32.xlu0 %v261, 64
  %v304 = vpop.permute.xlu0 %303
  %305 = vrot.lane.b32.xlu0 %v264, 64
  %v306 = vpop.permute.xlu0 %305
  %307 = vrot.lane.b32.xlu0 %v267, 64
  %v308 = vpop.permute.xlu0 %307
  %309 = vrot.lane.b32.xlu0 %v270, 64
  %v310 = vpop.permute.xlu0 %309
  %311 = vrot.lane.b32.xlu0 %v273, 64
  %v312 = vpop.permute.xlu0 %311
  %313 = vrot.lane.b32.xlu0 %v276, 64
  %v314 = vpop.permute.xlu0 %313
  %315 = vrot.lane.b32.xlu0 %v279, 64
  %v316 = vpop.permute.xlu0 %315
  %317 = vrot.lane.b32.xlu0 %v282, 64
  %v318 = vpop.permute.xlu0 %317
  %319 = vrot.lane.b32.xlu0 %v285, 64
  %v320 = vpop.permute.xlu0 %319
  %321 = vrot.lane.b32.xlu0 %v288, 64
  %v322 = vpop.permute.xlu0 %321
  %323 = vrot.lane.b32.xlu0 %v291, 64
  %v324 = vpop.permute.xlu0 %323
  %325 = vrot.lane.b32.xlu0 %v294, 64
  %v326 = vpop.permute.xlu0 %325
  %vm343 = vcmask 1045504
  %v344 = vrot.slane %v174, 2
  %v345 = vrot.slane %v175, 2
  %v346 = vsel %vm343, %v344, %v345
  %v347 = vrot.slane %v176, 2
  %v348 = vrot.slane %v177, 2
  %v349 = vsel %vm343, %v347, %v348
  %v350 = vrot.slane %v178, 2
  %v351 = vrot.slane %v179, 2
  %v352 = vsel %vm343, %v350, %v351
  %v353 = vrot.slane %v180, 2
  %v354 = vrot.slane %v181, 2
  %v355 = vsel %vm343, %v353, %v354
  %v356 = vrot.slane %v182, 2
  %v357 = vrot.slane %v183, 2
  %v358 = vsel %vm343, %v356, %v357
  %v359 = vrot.slane %v184, 2
  %v360 = vrot.slane %v185, 2
  %v361 = vsel %vm343, %v359, %v360
  %v362 = vrot.slane %v186, 2
  %v363 = vrot.slane %v187, 2
  %v364 = vsel %vm343, %v362, %v363
  %v365 = vrot.slane %v188, 2
  %v366 = vrot.slane %v189, 2
  %v367 = vsel %vm343, %v365, %v366
  %v368 = vrot.slane %v194, 2
  %v369 = vrot.slane %v195, 2
  %v370 = vsel %vm343, %v368, %v369
  %v371 = vrot.slane %v196, 2
  %v372 = vrot.slane %v197, 2
  %v373 = vsel %vm343, %v371, %v372
  %v374 = vrot.slane %v198, 2
  %v375 = vrot.slane %v199, 2
  %v376 = vsel %vm343, %v374, %v375
  %v377 = vrot.slane %v200, 2
  %v378 = vrot.slane %v201, 2
  %v379 = vsel %vm343, %v377, %v378
  %v380 = vrot.slane %v202, 2
  %v381 = vrot.slane %v203, 2
  %v382 = vsel %vm343, %v380, %v381
  %v383 = vrot.slane %v204, 2
  %v384 = vrot.slane %v205, 2
  %v385 = vsel %vm343, %v383, %v384
  %v386 = vrot.slane %v206, 2
  %v387 = vrot.slane %v207, 2
  %v388 = vsel %vm343, %v386, %v387
  %v389 = vrot.slane %v208, 2
  %v390 = vrot.slane %v209, 2
  %v391 = vsel %vm343, %v389, %v390
  %v408 = vsel %vm115, %v174, %v296
  %v409 = vsel %vm115, %v176, %v298
  %v410 = vsel %vm115, %v178, %v300
  %v411 = vsel %vm115, %v180, %v302
  %v412 = vsel %vm115, %v182, %v304
  %v413 = vsel %vm115, %v184, %v306
  %v414 = vsel %vm115, %v186, %v308
  %v415 = vsel %vm115, %v188, %v310
  %v416 = vsel %vm115, %v194, %v312
  %v417 = vsel %vm115, %v196, %v314
  %v418 = vsel %vm115, %v198, %v316
  %v419 = vsel %vm115, %v200, %v318
  %v420 = vsel %vm115, %v202, %v320
  %v421 = vsel %vm115, %v204, %v322
  %v422 = vsel %vm115, %v206, %v324
  %v423 = vsel %vm115, %v208, %v326
  %v424 = vpack.c.bf16 %v409, %v408
  %v425 = vpack.c.bf16 %v349, %v346
  %v426 = vpack.c.bf16 %v411, %v410
  %v427 = vpack.c.bf16 %v355, %v352
  %v428 = vpack.c.bf16 %v413, %v412
  %v429 = vpack.c.bf16 %v361, %v358
  %v430 = vpack.c.bf16 %v415, %v414
  %v431 = vpack.c.bf16 %v367, %v364
  %v432 = vpack.c.bf16 %v417, %v416
  %v433 = vpack.c.bf16 %v373, %v370
  %v434 = vpack.c.bf16 %v419, %v418
  %v435 = vpack.c.bf16 %v379, %v376
  %v436 = vpack.c.bf16 %v421, %v420
  %v437 = vpack.c.bf16 %v385, %v382
  %v438 = vpack.c.bf16 %v423, %v422
  %v439 = vpack.c.bf16 %v391, %v388
  %v440 = vld [vmem:[%s1] sm:$0xf]
  %v441 = vld [vmem:[%s1 + $0x4] sm:$0xf]
  %v442 = vld [vmem:[%s1 + $0x8] sm:$0xf]
  %v443 = vld [vmem:[%s1 + $0xc] sm:$0xf]
  %v444 = vld [vmem:[%s1 + $0x10] sm:$0xf]
  %v445 = vld [vmem:[%s1 + $0x14] sm:$0xf]
  %v446 = vld [vmem:[%s1 + $0x18] sm:$0xf]
  %v447 = vld [vmem:[%s1 + $0x1c] sm:$0xf]
  %v448 = vld [vmem:[%s1 + $0x20] sm:$0xf]
  %v449 = vld [vmem:[%s1 + $0x24] sm:$0xf]
  %v450 = vld [vmem:[%s1 + $0x28] sm:$0xf]
  %v451 = vld [vmem:[%s1 + $0x2c] sm:$0xf]
  %v452 = vld [vmem:[%s1 + $0x30] sm:$0xf]
  %v453 = vld [vmem:[%s1 + $0x34] sm:$0xf]
  %v454 = vld [vmem:[%s1 + $0x38] sm:$0xf]
  %v455 = vld [vmem:[%s1 + $0x3c] sm:$0xf]
  %v456 = vld [vmem:[%s1 + $0x40] sm:$0xf]
  %v457 = vld [vmem:[%s1 + $0x44] sm:$0xf]
  %v458 = vld [vmem:[%s1 + $0x48] sm:$0xf]
  %v459 = vld [vmem:[%s1 + $0x4c] sm:$0xf]
  %v460 = vld [vmem:[%s1 + $0x50] sm:$0xf]
  %v461 = vld [vmem:[%s1 + $0x54] sm:$0xf]
  %v462 = vld [vmem:[%s1 + $0x58] sm:$0xf]
  %v463 = vld [vmem:[%s1 + $0x5c] sm:$0xf]
  %v468 = vrot.slane %v190, 1
  %v469 = vrot.slane %v191, 1
  %v470 = vsel %vm246, %v468, %v469
  %v471 = vrot.slane %v210, 1
  %v472 = vrot.slane %v211, 1
  %v473 = vsel %vm246, %v471, %v472
  %474 = vrot.lane.b32.xlu0 %v470, 64
  %v475 = vpop.permute.xlu0 %474
  %476 = vrot.lane.b32.xlu0 %v473, 64
  %v477 = vpop.permute.xlu0 %476
  %v480 = vrot.slane %v190, 2
  %v481 = vrot.slane %v191, 2
  %v482 = vsel %vm343, %v480, %v481
  %v483 = vrot.slane %v210, 2
  %v484 = vrot.slane %v211, 2
  %v485 = vsel %vm343, %v483, %v484
  %v488 = vsel %vm115, %v190, %v475
  %v489 = vsel %vm115, %v210, %v477
  %v490 = vpack.c.bf16 %v410, %v409
  %v491 = vpack.c.bf16 %v352, %v349
  %v492 = vpack.c.bf16 %v412, %v411
  %v493 = vpack.c.bf16 %v358, %v355
  %v494 = vpack.c.bf16 %v414, %v413
  %v495 = vpack.c.bf16 %v364, %v361
  %v496 = vpack.c.bf16 %v488, %v415
  %v497 = vpack.c.bf16 %v482, %v367
  %v498 = vpack.c.bf16 %v418, %v417
  %v499 = vpack.c.bf16 %v376, %v373
  %v500 = vpack.c.bf16 %v420, %v419
  %v501 = vpack.c.bf16 %v382, %v379
  %v502 = vpack.c.bf16 %v422, %v421
  %v503 = vpack.c.bf16 %v388, %v385
  %v504 = vpack.c.bf16 %v489, %v423
  %v505 = vpack.c.bf16 %v485, %v391
  %s506 = scalar_lea.vmem %s1, 96
  %v507 = vld [vmem:[%s506] sm:$0xf]
  %v508 = vld [vmem:[%s506 + $0x4] sm:$0xf]
  %v509 = vld [vmem:[%s506 + $0x8] sm:$0xf]
  %v510 = vld [vmem:[%s506 + $0xc] sm:$0xf]
  %v511 = vld [vmem:[%s506 + $0x10] sm:$0xf]
  %v512 = vld [vmem:[%s506 + $0x14] sm:$0xf]
  %v513 = vld [vmem:[%s506 + $0x18] sm:$0xf]
  %v514 = vld [vmem:[%s506 + $0x1c] sm:$0xf]
  %v515 = vld [vmem:[%s506 + $0x20] sm:$0xf]
  %v516 = vld [vmem:[%s506 + $0x24] sm:$0xf]
  %v517 = vld [vmem:[%s506 + $0x28] sm:$0xf]
  %v518 = vld [vmem:[%s506 + $0x2c] sm:$0xf]
  %v519 = vld [vmem:[%s506 + $0x30] sm:$0xf]
  %v520 = vld [vmem:[%s506 + $0x34] sm:$0xf]
  %v521 = vld [vmem:[%s506 + $0x38] sm:$0xf]
  %v522 = vld [vmem:[%s506 + $0x3c] sm:$0xf]
  %v523 = vld [vmem:[%s506 + $0x40] sm:$0xf]
  %v524 = vld [vmem:[%s506 + $0x44] sm:$0xf]
  %v525 = vld [vmem:[%s506 + $0x48] sm:$0xf]
  %v526 = vld [vmem:[%s506 + $0x4c] sm:$0xf]
  %v527 = vld [vmem:[%s506 + $0x50] sm:$0xf]
  %v528 = vld [vmem:[%s506 + $0x54] sm:$0xf]
  %v529 = vld [vmem:[%s506 + $0x58] sm:$0xf]
  %v530 = vld [vmem:[%s506 + $0x5c] sm:$0xf]
  %v555 = vunpack.c.l.b16 %v507
  %v556 = vunpack.c.l.b16 %v508
  %v557 = vunpack.c.l.b16 %v509
  %v558 = vunpack.c.l.b16 %v510
  %v559 = vunpack.c.l.b16 %v511
  %v560 = vunpack.c.l.b16 %v512
  %v561 = vunpack.c.l.b16 %v513
  %v562 = vunpack.c.l.b16 %v514
  %v563 = vunpack.c.l.b16 %v515
  %v564 = vunpack.c.l.b16 %v516
  %v565 = vunpack.c.l.b16 %v517
  %v566 = vunpack.c.l.b16 %v518
  %v567 = vunpack.c.l.b16 %v519
  %v568 = vunpack.c.l.b16 %v520
  %v569 = vunpack.c.l.b16 %v521
  %v570 = vunpack.c.l.b16 %v522
  %v571 = vunpack.c.l.b16 %v523
  %v572 = vunpack.c.l.b16 %v524
  %v573 = vunpack.c.l.b16 %v525
  %v574 = vunpack.c.l.b16 %v526
  %v575 = vunpack.c.l.b16 %v527
  %v576 = vunpack.c.l.b16 %v528
  %v577 = vunpack.c.l.b16 %v529
  %v578 = vunpack.c.l.b16 %v530
  %v579 = vpack.c.b16 %v556, %v555
  %v580 = vpack.c.b16 %v558, %v557
  %v581 = vpack.c.b16 %v560, %v559
  %v582 = vpack.c.b16 %v562, %v561
  %v583 = vpack.c.b16 %v564, %v563
  %v584 = vpack.c.b16 %v566, %v565
  %v585 = vpack.c.b16 %v568, %v567
  %v586 = vpack.c.b16 %v570, %v569
  %v587 = vpack.c.b16 %v572, %v571
  %v588 = vpack.c.b16 %v574, %v573
  %v589 = vpack.c.b16 %v576, %v575
  %v590 = vpack.c.b16 %v578, %v577
  %v604 = vsel %vm115, %v491, 0
  %v607 = vsel %vm115, %v493, 0
  %v610 = vsel %vm115, %v495, 0
  %v613 = vsel %vm115, %v497, 0
  %v616 = vsel %vm115, %v499, 0
  %v619 = vsel %vm115, %v501, 0
  %v622 = vsel %vm115, %v503, 0
  %v625 = vsel %vm115, %v505, 0
  %627 = vmatprep.subr.bf16.mxu0 0
  %628 = vmatpush1.bf16.msra.mxu0 %v579
  %629 = vmatprep.subr.bf16.mxu0 0
  %630 = vmatpush1.bf16.msra.mxu0 %v580
  %631 = vmatprep.subr.bf16.mxu0 0
  %632 = vmatpush1.bf16.msra.mxu0 %v581
  %633 = vmatprep.subr.bf16.mxu0 0
  %634 = vmatpush1.bf16.msra.mxu0 %v582
  %635 = vmatprep.subr.bf16.mxu0 0
  %636 = vmatpush1.bf16.msra.mxu0 %v583
  %637 = vmatprep.subr.bf16.mxu0 0
  %638 = vmatpush1.bf16.msra.mxu0 %v584
  %639 = vmatprep.subr.bf16.mxu0 0
  %640 = vmatpush1.bf16.msra.mxu0 %v585
  %641 = vmatprep.subr.bf16.mxu0 0
  %642 = vmatpush1.bf16.msra.mxu0 %v586
  %643 = vmatprep.subr.bf16.mxu0 0
  %644 = vmatpush1.bf16.msra.mxu0 %v587
  %645 = vmatprep.subr.bf16.mxu0 0
  %646 = vmatpush1.bf16.msra.mxu0 %v588
  %647 = vmatprep.subr.bf16.mxu0 0
  %648 = vmatpush1.bf16.msra.mxu0 %v589
  %649 = vmatprep.subr.bf16.mxu0 0
  %650 = vmatpush1.bf16.msra.mxu0 %v590
  %651 = vmatprep.subr.bf16.mxu0 0
  %652 = vmatpush1.bf16.msra.mxu0 0
  %653 = vmatprep.subr.bf16.mxu0 0
  %654 = vmatpush1.bf16.msra.mxu0 0
  %655 = vmatprep.subr.bf16.mxu0 0
  %656 = vmatpush1.bf16.msra.mxu0 0
  %657 = vmatprep.subr.bf16.mxu0 0
  %658 = vmatpush1.bf16.msra.mxu0 0
  %659 = vmatprep.mubr.bf16.mxu0 %v604
  %660 = vmatmul.mubr.bf16.gmra.mrb[0].mxu0 %v490
  %v661 = vpop.f32.mrb[0].mxu0
  %v662 = vadd.f32 0.0, %v661
  %v663 = vpop.f32.mrb[0].mxu0
  %v664 = vpop.f32.mrb[0].mxu0
  %v665 = vadd.f32 0.0, %v664
  %v666 = vpop.f32.mrb[0].mxu0
  %667 = vmatprep.mubr.bf16.mxu0 %v607
  %668 = vmatmul.mubr.bf16.gmra.mrb[0].mxu0 %v492
  %v669 = vpop.f32.mrb[0].mxu0
  %v670 = vadd.f32 0.0, %v669
  %v671 = vpop.f32.mrb[0].mxu0
  %v672 = vpop.f32.mrb[0].mxu0
  %v673 = vadd.f32 0.0, %v672
  %v674 = vpop.f32.mrb[0].mxu0
  %675 = vmatprep.mubr.bf16.mxu0 %v610
  %676 = vmatmul.mubr.bf16.gmra.mrb[0].mxu0 %v494
  %v677 = vpop.f32.mrb[0].mxu0
  %v678 = vadd.f32 0.0, %v677
  %v679 = vpop.f32.mrb[0].mxu0
  %v680 = vpop.f32.mrb[0].mxu0
  %v681 = vadd.f32 0.0, %v680
  %v682 = vpop.f32.mrb[0].mxu0
  %683 = vmatprep.mubr.bf16.mxu0 %v613
  %684 = vmatmul.mubr.bf16.gmra.mrb[0].mxu0 %v496
  %v685 = vpop.f32.mrb[0].mxu0
  %v686 = vadd.f32 0.0, %v685
  %v687 = vpop.f32.mrb[0].mxu0
  %v688 = vpop.f32.mrb[0].mxu0
  %v689 = vadd.f32 0.0, %v688
  %v690 = vpop.f32.mrb[0].mxu0
  %691 = vmatprep.mubr.bf16.mxu0 %v616
  %692 = vmatmul.mubr.bf16.gmra.mrb[0].mxu0 %v498
  %v693 = vpop.f32.mrb[0].mxu0
  %v694 = vadd.f32 0.0, %v693
  %v695 = vpop.f32.mrb[0].mxu0
  %v696 = vpop.f32.mrb[0].mxu0
  %v697 = vadd.f32 0.0, %v696
  %v698 = vpop.f32.mrb[0].mxu0
  %699 = vmatprep.mubr.bf16.mxu0 %v619
  %700 = vmatmul.mubr.bf16.gmra.mrb[0].mxu0 %v500
  %v701 = vpop.f32.mrb[0].mxu0
  %v702 = vadd.f32 0.0, %v701
  %v703 = vpop.f32.mrb[0].mxu0
  %v704 = vpop.f32.mrb[0].mxu0
  %v705 = vadd.f32 0.0, %v704
  %v706 = vpop.f32.mrb[0].mxu0
  %707 = vmatprep.mubr.bf16.mxu0 %v622
  %708 = vmatmul.mubr.bf16.gmra.mrb[0].mxu0 %v502
  %v709 = vpop.f32.mrb[0].mxu0
  %v710 = vadd.f32 0.0, %v709
  %v711 = vpop.f32.mrb[0].mxu0
  %v712 = vpop.f32.mrb[0].mxu0
  %v713 = vadd.f32 0.0, %v712
  %v714 = vpop.f32.mrb[0].mxu0
  %715 = vmatprep.mubr.bf16.mxu0 %v625
  %716 = vmatmul.mubr.bf16.gmra.mrb[0].mxu0 %v504
  %v717 = vpop.f32.mrb[0].mxu0
  %v718 = vadd.f32 0.0, %v717
  %v719 = vpop.f32.mrb[0].mxu0
  %v720 = vpop.f32.mrb[0].mxu0
  %v721 = vadd.f32 0.0, %v720
  %v722 = vpop.f32.mrb[0].mxu0
  %723 = vdwg.mxu0
  %v748 = vunpack.c.l.b16 %v440
  %v749 = vunpack.c.l.b16 %v441
  %v750 = vunpack.c.l.b16 %v442
  %v751 = vunpack.c.l.b16 %v443
  %v752 = vunpack.c.l.b16 %v444
  %v753 = vunpack.c.l.b16 %v445
  %v754 = vunpack.c.l.b16 %v446
  %v755 = vunpack.c.l.b16 %v447
  %v756 = vunpack.c.l.b16 %v448
  %v757 = vunpack.c.l.b16 %v449
  %v758 = vunpack.c.l.b16 %v450
  %v759 = vunpack.c.l.b16 %v451
  %v760 = vunpack.c.l.b16 %v452
  %v761 = vunpack.c.l.b16 %v453
  %v762 = vunpack.c.l.b16 %v454
  %v763 = vunpack.c.l.b16 %v455
  %v764 = vunpack.c.l.b16 %v456
  %v765 = vunpack.c.l.b16 %v457
  %v766 = vunpack.c.l.b16 %v458
  %v767 = vunpack.c.l.b16 %v459
  %v768 = vunpack.c.l.b16 %v460
  %v769 = vunpack.c.l.b16 %v461
  %v770 = vunpack.c.l.b16 %v462
  %v771 = vunpack.c.l.b16 %v463
  %v772 = vpack.c.b16 %v749, %v748
  %v773 = vpack.c.b16 %v751, %v750
  %v774 = vpack.c.b16 %v753, %v752
  %v775 = vpack.c.b16 %v755, %v754
  %v776 = vpack.c.b16 %v757, %v756
  %v777 = vpack.c.b16 %v759, %v758
  %v778 = vpack.c.b16 %v761, %v760
  %v779 = vpack.c.b16 %v763, %v762
  %v780 = vpack.c.b16 %v765, %v764
  %v781 = vpack.c.b16 %v767, %v766
  %v782 = vpack.c.b16 %v769, %v768
  %v783 = vpack.c.b16 %v771, %v770
  %v797 = vsel %vm115, %v425, 0
  %v800 = vsel %vm115, %v427, 0
  %v803 = vsel %vm115, %v429, 0
  %v806 = vsel %vm115, %v431, 0
  %v809 = vsel %vm115, %v433, 0
  %v812 = vsel %vm115, %v435, 0
  %v815 = vsel %vm115, %v437, 0
  %v818 = vsel %vm115, %v439, 0
  %820 = vmatprep.subr.bf16.mxu0 0
  %821 = vmatpush1.bf16.msra.mxu0 %v772
  %822 = vmatprep.subr.bf16.mxu0 0
  %823 = vmatpush1.bf16.msra.mxu0 %v773
  %824 = vmatprep.subr.bf16.mxu0 0
  %825 = vmatpush1.bf16.msra.mxu0 %v774
  %826 = vmatprep.subr.bf16.mxu0 0
  %827 = vmatpush1.bf16.msra.mxu0 %v775
  %828 = vmatprep.subr.bf16.mxu0 0
  %829 = vmatpush1.bf16.msra.mxu0 %v776
  %830 = vmatprep.subr.bf16.mxu0 0
  %831 = vmatpush1.bf16.msra.mxu0 %v777
  %832 = vmatprep.subr.bf16.mxu0 0
  %833 = vmatpush1.bf16.msra.mxu0 %v778
  %834 = vmatprep.subr.bf16.mxu0 0
  %835 = vmatpush1.bf16.msra.mxu0 %v779
  %836 = vmatprep.subr.bf16.mxu0 0
  %837 = vmatpush1.bf16.msra.mxu0 %v780
  %838 = vmatprep.subr.bf16.mxu0 0
  %839 = vmatpush1.bf16.msra.mxu0 %v781
  %840 = vmatprep.subr.bf16.mxu0 0
  %841 = vmatpush1.bf16.msra.mxu0 %v782
  %842 = vmatprep.subr.bf16.mxu0 0
  %843 = vmatpush1.bf16.msra.mxu0 %v783
  %844 = vmatprep.subr.bf16.mxu0 0
  %845 = vmatpush1.bf16.msra.mxu0 0
  %846 = vmatprep.subr.bf16.mxu0 0
  %847 = vmatpush1.bf16.msra.mxu0 0
  %848 = vmatprep.subr.bf16.mxu0 0
  %849 = vmatpush1.bf16.msra.mxu0 0
  %850 = vmatprep.subr.bf16.mxu0 0
  %851 = vmatpush1.bf16.msra.mxu0 0
  %852 = vmatprep.mubr.bf16.mxu0 %v797
  %853 = vmatmul.mubr.bf16.gmra.mrb[0].mxu0 %v424
  %v854 = vpop.f32.mrb[0].mxu0
  %v855 = vadd.f32 %v662, %v854
  %v856 = vpop.f32.mrb[0].mxu0
  %v857 = vpop.f32.mrb[0].mxu0
  %v858 = vadd.f32 %v665, %v857
  %v859 = vpop.f32.mrb[0].mxu0
  %860 = vmatprep.mubr.bf16.mxu0 %v800
  %861 = vmatmul.mubr.bf16.gmra.mrb[0].mxu0 %v426
  %v862 = vpop.f32.mrb[0].mxu0
  %v863 = vadd.f32 %v670, %v862
  %v864 = vpop.f32.mrb[0].mxu0
  %v865 = vpop.f32.mrb[0].mxu0
  %v866 = vadd.f32 %v673, %v865
  %v867 = vpop.f32.mrb[0].mxu0
  %868 = vmatprep.mubr.bf16.mxu0 %v803
  %869 = vmatmul.mubr.bf16.gmra.mrb[0].mxu0 %v428
  %v870 = vpop.f32.mrb[0].mxu0
  %v871 = vadd.f32 %v678, %v870
  %v872 = vpop.f32.mrb[0].mxu0
  %v873 = vpop.f32.mrb[0].mxu0
  %v874 = vadd.f32 %v681, %v873
  %v875 = vpop.f32.mrb[0].mxu0
  %876 = vmatprep.mubr.bf16.mxu0 %v806
  %877 = vmatmul.mubr.bf16.gmra.mrb[0].mxu0 %v430
  %v878 = vpop.f32.mrb[0].mxu0
  %v879 = vadd.f32 %v686, %v878
  %v880 = vpop.f32.mrb[0].mxu0
  %v881 = vpop.f32.mrb[0].mxu0
  %v882 = vadd.f32 %v689, %v881
  %v883 = vpop.f32.mrb[0].mxu0
  %884 = vmatprep.mubr.bf16.mxu0 %v809
  %885 = vmatmul.mubr.bf16.gmra.mrb[0].mxu0 %v432
  %v886 = vpop.f32.mrb[0].mxu0
  %v887 = vadd.f32 %v694, %v886
  %v888 = vpop.f32.mrb[0].mxu0
  %v889 = vpop.f32.mrb[0].mxu0
  %v890 = vadd.f32 %v697, %v889
  %v891 = vpop.f32.mrb[0].mxu0
  %892 = vmatprep.mubr.bf16.mxu0 %v812
  %893 = vmatmul.mubr.bf16.gmra.mrb[0].mxu0 %v434
  %v894 = vpop.f32.mrb[0].mxu0
  %v895 = vadd.f32 %v702, %v894
  %v896 = vpop.f32.mrb[0].mxu0
  %v897 = vpop.f32.mrb[0].mxu0
  %v898 = vadd.f32 %v705, %v897
  %v899 = vpop.f32.mrb[0].mxu0
  %900 = vmatprep.mubr.bf16.mxu0 %v815
  %901 = vmatmul.mubr.bf16.gmra.mrb[0].mxu0 %v436
  %v902 = vpop.f32.mrb[0].mxu0
  %v903 = vadd.f32 %v710, %v902
  %v904 = vpop.f32.mrb[0].mxu0
  %v905 = vpop.f32.mrb[0].mxu0
  %v906 = vadd.f32 %v713, %v905
  %v907 = vpop.f32.mrb[0].mxu0
  %908 = vmatprep.mubr.bf16.mxu0 %v818
  %909 = vmatmul.mubr.bf16.gmra.mrb[0].mxu0 %v438
  %v910 = vpop.f32.mrb[0].mxu0
  %v911 = vadd.f32 %v718, %v910
  %v912 = vpop.f32.mrb[0].mxu0
  %v913 = vpop.f32.mrb[0].mxu0
  %v914 = vadd.f32 %v721, %v913
  %v915 = vpop.f32.mrb[0].mxu0
  %916 = vdwg.mxu0
  %v921 = vrot.slane %v192, 1
  %v922 = vrot.slane %v193, 1
  %v923 = vsel %vm246, %v921, %v922
  %v924 = vrot.slane %v212, 1
  %v925 = vrot.slane %v213, 1
  %v926 = vsel %vm246, %v924, %v925
  %927 = vrot.lane.b32.xlu0 %v923, 64
  %v928 = vpop.permute.xlu0 %927
  %929 = vrot.lane.b32.xlu0 %v926, 64
  %v930 = vpop.permute.xlu0 %929
  %v933 = vrot.slane %v192, 2
  %v934 = vrot.slane %v193, 2
  %v935 = vsel %vm343, %v933, %v934
  %v936 = vrot.slane %v212, 2
  %v937 = vrot.slane %v213, 2
  %v938 = vsel %vm343, %v936, %v937
  %v941 = vsel %vm115, %v192, %v928
  %v942 = vsel %vm115, %v212, %v930
  %v943 = vpack.c.bf16 %v941, %v488
  %v944 = vpack.c.bf16 %v935, %v482
  %v945 = vpack.c.bf16 %v942, %v489
  %v946 = vpack.c.bf16 %v938, %v485
  %s947 = scalar_lea.vmem %s1, 192
  %v948 = vld [vmem:[%s947] sm:$0xf]
  %v949 = vld [vmem:[%s947 + $0x4] sm:$0xf]
  %v950 = vld [vmem:[%s947 + $0x8] sm:$0xf]
  %v951 = vld [vmem:[%s947 + $0xc] sm:$0xf]
  %v952 = vld [vmem:[%s947 + $0x10] sm:$0xf]
  %v953 = vld [vmem:[%s947 + $0x14] sm:$0xf]
  %v954 = vld [vmem:[%s947 + $0x18] sm:$0xf]
  %v955 = vld [vmem:[%s947 + $0x1c] sm:$0xf]
  %v956 = vld [vmem:[%s947 + $0x20] sm:$0xf]
  %v957 = vld [vmem:[%s947 + $0x24] sm:$0xf]
  %v958 = vld [vmem:[%s947 + $0x28] sm:$0xf]
  %v959 = vld [vmem:[%s947 + $0x2c] sm:$0xf]
  %v960 = vld [vmem:[%s947 + $0x30] sm:$0xf]
  %v961 = vld [vmem:[%s947 + $0x34] sm:$0xf]
  %v962 = vld [vmem:[%s947 + $0x38] sm:$0xf]
  %v963 = vld [vmem:[%s947 + $0x3c] sm:$0xf]
  %v964 = vld [vmem:[%s947 + $0x40] sm:$0xf]
  %v965 = vld [vmem:[%s947 + $0x44] sm:$0xf]
  %v966 = vld [vmem:[%s947 + $0x48] sm:$0xf]
  %v967 = vld [vmem:[%s947 + $0x4c] sm:$0xf]
  %v968 = vld [vmem:[%s947 + $0x50] sm:$0xf]
  %v969 = vld [vmem:[%s947 + $0x54] sm:$0xf]
  %v970 = vld [vmem:[%s947 + $0x58] sm:$0xf]
  %v971 = vld [vmem:[%s947 + $0x5c] sm:$0xf]
  %v996 = vunpack.c.l.b16 %v948
  %v997 = vunpack.c.l.b16 %v949
  %v998 = vunpack.c.l.b16 %v950
  %v999 = vunpack.c.l.b16 %v951
  %v1000 = vunpack.c.l.b16 %v952
  %v1001 = vunpack.c.l.b16 %v953
  %v1002 = vunpack.c.l.b16 %v954
  %v1003 = vunpack.c.l.b16 %v955
  %v1004 = vunpack.c.l.b16 %v956
  %v1005 = vunpack.c.l.b16 %v957
  %v1006 = vunpack.c.l.b16 %v958
  %v1007 = vunpack.c.l.b16 %v959
  %v1008 = vunpack.c.l.b16 %v960
  %v1009 = vunpack.c.l.b16 %v961
  %v1010 = vunpack.c.l.b16 %v962
  %v1011 = vunpack.c.l.b16 %v963
  %v1012 = vunpack.c.l.b16 %v964
  %v1013 = vunpack.c.l.b16 %v965
  %v1014 = vunpack.c.l.b16 %v966
  %v1015 = vunpack.c.l.b16 %v967
  %v1016 = vunpack.c.l.b16 %v968
  %v1017 = vunpack.c.l.b16 %v969
  %v1018 = vunpack.c.l.b16 %v970
  %v1019 = vunpack.c.l.b16 %v971
  %v1020 = vpack.c.b16 %v997, %v996
  %v1021 = vpack.c.b16 %v999, %v998
  %v1022 = vpack.c.b16 %v1001, %v1000
  %v1023 = vpack.c.b16 %v1003, %v1002
  %v1024 = vpack.c.b16 %v1005, %v1004
  %v1025 = vpack.c.b16 %v1007, %v1006
  %v1026 = vpack.c.b16 %v1009, %v1008
  %v1027 = vpack.c.b16 %v1011, %v1010
  %v1028 = vpack.c.b16 %v1013, %v1012
  %v1029 = vpack.c.b16 %v1015, %v1014
  %v1030 = vpack.c.b16 %v1017, %v1016
  %v1031 = vpack.c.b16 %v1019, %v1018
  %v1045 = vsel %vm115, %v944, 0
  %v1048 = vsel %vm115, %v946, 0
  %1050 = vmatprep.subr.bf16.mxu0 0
  %1051 = vmatpush1.bf16.msra.mxu0 %v1020
  %1052 = vmatprep.subr.bf16.mxu0 0
  %1053 = vmatpush1.bf16.msra.mxu0 %v1021
  %1054 = vmatprep.subr.bf16.mxu0 0
  %1055 = vmatpush1.bf16.msra.mxu0 %v1022
  %1056 = vmatprep.subr.bf16.mxu0 0
  %1057 = vmatpush1.bf16.msra.mxu0 %v1023
  %1058 = vmatprep.subr.bf16.mxu0 0
  %1059 = vmatpush1.bf16.msra.mxu0 %v1024
  %1060 = vmatprep.subr.bf16.mxu0 0
  %1061 = vmatpush1.bf16.msra.mxu0 %v1025
  %1062 = vmatprep.subr.bf16.mxu0 0
  %1063 = vmatpush1.bf16.msra.mxu0 %v1026
  %1064 = vmatprep.subr.bf16.mxu0 0
  %1065 = vmatpush1.bf16.msra.mxu0 %v1027
  %1066 = vmatprep.subr.bf16.mxu0 0
  %1067 = vmatpush1.bf16.msra.mxu0 %v1028
  %1068 = vmatprep.subr.bf16.mxu0 0
  %1069 = vmatpush1.bf16.msra.mxu0 %v1029
  %1070 = vmatprep.subr.bf16.mxu0 0
  %1071 = vmatpush1.bf16.msra.mxu0 %v1030
  %1072 = vmatprep.subr.bf16.mxu0 0
  %1073 = vmatpush1.bf16.msra.mxu0 %v1031
  %1074 = vmatprep.subr.bf16.mxu0 0
  %1075 = vmatpush1.bf16.msra.mxu0 0
  %1076 = vmatprep.subr.bf16.mxu0 0
  %1077 = vmatpush1.bf16.msra.mxu0 0
  %1078 = vmatprep.subr.bf16.mxu0 0
  %1079 = vmatpush1.bf16.msra.mxu0 0
  %1080 = vmatprep.subr.bf16.mxu0 0
  %1081 = vmatpush1.bf16.msra.mxu0 0
  %1082 = vmatprep.mubr.bf16.mxu0 %v800
  %1083 = vmatmul.mubr.bf16.gmra.mrb[0].mxu0 %v426
  %v1084 = vpop.f32.mrb[0].mxu0
  %v1085 = vadd.f32 0.0, %v1084
  %v1086 = vpop.f32.mrb[0].mxu0
  %v1087 = vpop.f32.mrb[0].mxu0
  %v1088 = vadd.f32 0.0, %v1087
  %v1089 = vpop.f32.mrb[0].mxu0
  %1090 = vmatprep.mubr.bf16.mxu0 %v803
  %1091 = vmatmul.mubr.bf16.gmra.mrb[0].mxu0 %v428
  %v1092 = vpop.f32.mrb[0].mxu0
  %v1093 = vadd.f32 0.0, %v1092
  %v1094 = vpop.f32.mrb[0].mxu0
  %v1095 = vpop.f32.mrb[0].mxu0
  %v1096 = vadd.f32 0.0, %v1095
  %v1097 = vpop.f32.mrb[0].mxu0
  %1098 = vmatprep.mubr.bf16.mxu0 %v806
  %1099 = vmatmul.mubr.bf16.gmra.mrb[0].mxu0 %v430
  %v1100 = vpop.f32.mrb[0].mxu0
  %v1101 = vadd.f32 0.0, %v1100
  %v1102 = vpop.f32.mrb[0].mxu0
  %v1103 = vpop.f32.mrb[0].mxu0
  %v1104 = vadd.f32 0.0, %v1103
  %v1105 = vpop.f32.mrb[0].mxu0
  %1106 = vmatprep.mubr.bf16.mxu0 %v1045
  %1107 = vmatmul.mubr.bf16.gmra.mrb[0].mxu0 %v943
  %v1108 = vpop.f32.mrb[0].mxu0
  %v1109 = vadd.f32 0.0, %v1108
  %v1110 = vpop.f32.mrb[0].mxu0
  %v1111 = vpop.f32.mrb[0].mxu0
  %v1112 = vadd.f32 0.0, %v1111
  %v1113 = vpop.f32.mrb[0].mxu0
  %1114 = vmatprep.mubr.bf16.mxu0 %v812
  %1115 = vmatmul.mubr.bf16.gmra.mrb[0].mxu0 %v434
  %v1116 = vpop.f32.mrb[0].mxu0
  %v1117 = vadd.f32 0.0, %v1116
  %v1118 = vpop.f32.mrb[0].mxu0
  %v1119 = vpop.f32.mrb[0].mxu0
  %v1120 = vadd.f32 0.0, %v1119
  %v1121 = vpop.f32.mrb[0].mxu0
  %1122 = vmatprep.mubr.bf16.mxu0 %v815
  %1123 = vmatmul.mubr.bf16.gmra.mrb[0].mxu0 %v436
  %v1124 = vpop.f32.mrb[0].mxu0
  %v1125 = vadd.f32 0.0, %v1124
  %v1126 = vpop.f32.mrb[0].mxu0
  %v1127 = vpop.f32.mrb[0].mxu0
  %v1128 = vadd.f32 0.0, %v1127
  %v1129 = vpop.f32.mrb[0].mxu0
  %1130 = vmatprep.mubr.bf16.mxu0 %v818
  %1131 = vmatmul.mubr.bf16.gmra.mrb[0].mxu0 %v438
  %v1132 = vpop.f32.mrb[0].mxu0
  %v1133 = vadd.f32 0.0, %v1132
  %v1134 = vpop.f32.mrb[0].mxu0
  %v1135 = vpop.f32.mrb[0].mxu0
  %v1136 = vadd.f32 0.0, %v1135
  %v1137 = vpop.f32.mrb[0].mxu0
  %1138 = vmatprep.mubr.bf16.mxu0 %v1048
  %1139 = vmatmul.mubr.bf16.gmra.mrb[0].mxu0 %v945
  %v1140 = vpop.f32.mrb[0].mxu0
  %v1141 = vadd.f32 0.0, %v1140
  %v1142 = vpop.f32.mrb[0].mxu0
  %v1143 = vpop.f32.mrb[0].mxu0
  %v1144 = vadd.f32 0.0, %v1143
  %v1145 = vpop.f32.mrb[0].mxu0
  %1146 = vdwg.mxu0
  %v1147 = vadd.f32 %v855, %v1085
  %v1148 = vadd.f32 %v858, %v1088
  %v1149 = vadd.f32 %v863, %v1093
  %v1150 = vadd.f32 %v866, %v1096
  %v1151 = vadd.f32 %v871, %v1101
  %v1152 = vadd.f32 %v874, %v1104
  %v1153 = vadd.f32 %v879, %v1109
  %v1154 = vadd.f32 %v882, %v1112
  %v1155 = vadd.f32 %v887, %v1117
  %v1156 = vadd.f32 %v890, %v1120
  %v1157 = vadd.f32 %v895, %v1125
  %v1158 = vadd.f32 %v898, %v1128
  %v1159 = vadd.f32 %v903, %v1133
  %v1160 = vadd.f32 %v906, %v1136
  %v1161 = vadd.f32 %v911, %v1141
  %v1162 = vadd.f32 %v914, %v1144
  %v1163 = vpack.c.bf16 %v1147, %v1147
  %v1164 = vpack.c.bf16 %v1148, %v1148
  %v1165 = vpack.c.bf16 %v1149, %v1149
  %v1166 = vpack.c.bf16 %v1150, %v1150
  %v1167 = vpack.c.bf16 %v1151, %v1151
  %v1168 = vpack.c.bf16 %v1152, %v1152
  %v1169 = vpack.c.bf16 %v1153, %v1153
  %v1170 = vpack.c.bf16 %v1154, %v1154
  %v1171 = vpack.c.bf16 %v1155, %v1155
  %v1172 = vpack.c.bf16 %v1156, %v1156
  %v1173 = vpack.c.bf16 %v1157, %v1157
  %v1174 = vpack.c.bf16 %v1158, %v1158
  %v1175 = vpack.c.bf16 %v1159, %v1159
  %v1176 = vpack.c.bf16 %v1160, %v1160
  %v1177 = vpack.c.bf16 %v1161, %v1161
  %v1178 = vpack.c.bf16 %v1162, %v1162
  %vm1179 = vcmask 519168
  %1180 = vst.msk [vmem:[%s4] sm:$0xf] %vm1179, %v1163
  %1181 = vst.msk [vmem:[%s4 + $0x4] sm:$0xf] %vm1179, %v1164
  %1182 = vst.msk [vmem:[%s4 + $0x8] sm:$0xf] %vm1179, %v1165
  %1183 = vst.msk [vmem:[%s4 + $0xc] sm:$0xf] %vm1179, %v1166
  %1184 = vst.msk [vmem:[%s4 + $0x10] sm:$0xf] %vm1179, %v1167
  %1185 = vst.msk [vmem:[%s4 + $0x14] sm:$0xf] %vm1179, %v1168
  %1186 = vst.msk [vmem:[%s4 + $0x18] sm:$0xf] %vm1179, %v1169
  %1187 = vst.msk [vmem:[%s4 + $0x1c] sm:$0xf] %vm1179, %v1170
  %1188 = vst.msk [vmem:[%s4 + $0x20] sm:$0xf] %vm1179, %v1171
  %1189 = vst.msk [vmem:[%s4 + $0x24] sm:$0xf] %vm1179, %v1172
  %1190 = vst.msk [vmem:[%s4 + $0x28] sm:$0xf] %vm1179, %v1173
  %1191 = vst.msk [vmem:[%s4 + $0x2c] sm:$0xf] %vm1179, %v1174
  %1192 = vst.msk [vmem:[%s4 + $0x30] sm:$0xf] %vm1179, %v1175
  %1193 = vst.msk [vmem:[%s4 + $0x34] sm:$0xf] %vm1179, %v1176
  %1194 = vst.msk [vmem:[%s4 + $0x38] sm:$0xf] %vm1179, %v1177
  %1195 = vst.msk [vmem:[%s4 + $0x3c] sm:$0xf] %vm1179, %v1178
  %v1196 = vsel %vm115, %v1147, 0.0
  %v1197 = vsel %vm115, %v1148, 0.0
  %v1198 = vadd.f32 %v1196, %v1197
  %v1199 = vsel %vm115, %v1149, 0.0
  %v1200 = vadd.f32 %v1198, %v1199
  %v1201 = vsel %vm115, %v1150, 0.0
  %v1202 = vadd.f32 %v1200, %v1201
  %v1203 = vsel %vm115, %v1151, 0.0
  %v1204 = vadd.f32 %v1202, %v1203
  %v1205 = vsel %vm115, %v1152, 0.0
  %v1206 = vadd.f32 %v1204, %v1205
  %v1207 = vsel %vm115, %v1153, 0.0
  %v1208 = vadd.f32 %v1206, %v1207
  %v1209 = vsel %vm115, %v1154, 0.0
  %v1210 = vadd.f32 %v1208, %v1209
  %v1211 = vsel %vm115, %v1155, 0.0
  %v1212 = vadd.f32 %v1210, %v1211
  %v1213 = vsel %vm115, %v1156, 0.0
  %v1214 = vadd.f32 %v1212, %v1213
  %v1215 = vsel %vm115, %v1157, 0.0
  %v1216 = vadd.f32 %v1214, %v1215
  %v1217 = vsel %vm115, %v1158, 0.0
  %v1218 = vadd.f32 %v1216, %v1217
  %v1219 = vsel %vm115, %v1159, 0.0
  %v1220 = vadd.f32 %v1218, %v1219
  %v1221 = vsel %vm115, %v1160, 0.0
  %v1222 = vadd.f32 %v1220, %v1221
  %v1223 = vsel %vm115, %v1161, 0.0
  %v1224 = vadd.f32 %v1222, %v1223
  %v1225 = vsel %vm115, %v1162, 0.0
  %v1226 = vadd.f32 %v1224, %v1225
  %v1227 = vrot.slane %v1226, 4
  %v1228 = vadd.f32 %v1226, %v1227
  %v1229 = vrot.slane %v1228, 2
  %v1230 = vadd.f32 %v1228, %v1229
  %v1231 = vrot.slane %v1230, 1
  %v1232 = vadd.f32 %v1230, %v1231
  %vm1233 = vcmask 516096
  %1234 = vst.msk [vmem:[%s5] sm:$0x1] %vm1233, %v1232
  %v1235 = vmul.f32 %v1147, %v1147
  %v1236 = vmul.f32 %v1148, %v1148
  %v1237 = vmul.f32 %v1149, %v1149
  %v1238 = vmul.f32 %v1150, %v1150
  %v1239 = vmul.f32 %v1151, %v1151
  %v1240 = vmul.f32 %v1152, %v1152
  %v1241 = vmul.f32 %v1153, %v1153
  %v1242 = vmul.f32 %v1154, %v1154
  %v1243 = vmul.f32 %v1155, %v1155
  %v1244 = vmul.f32 %v1156, %v1156
  %v1245 = vmul.f32 %v1157, %v1157
  %v1246 = vmul.f32 %v1158, %v1158
  %v1247 = vmul.f32 %v1159, %v1159
  %v1248 = vmul.f32 %v1160, %v1160
  %v1249 = vmul.f32 %v1161, %v1161
  %v1250 = vmul.f32 %v1162, %v1162
  %v1251 = vsel %vm115, %v1235, 0.0
  %v1252 = vsel %vm115, %v1236, 0.0
  %v1253 = vadd.f32 %v1251, %v1252
  %v1254 = vsel %vm115, %v1237, 0.0
  %v1255 = vadd.f32 %v1253, %v1254
  %v1256 = vsel %vm115, %v1238, 0.0
  %v1257 = vadd.f32 %v1255, %v1256
  %v1258 = vsel %vm115, %v1239, 0.0
  %v1259 = vadd.f32 %v1257, %v1258
  %v1260 = vsel %vm115, %v1240, 0.0
  %v1261 = vadd.f32 %v1259, %v1260
  %v1262 = vsel %vm115, %v1241, 0.0
  %v1263 = vadd.f32 %v1261, %v1262
  %v1264 = vsel %vm115, %v1242, 0.0
  %v1265 = vadd.f32 %v1263, %v1264
  %v1266 = vsel %vm115, %v1243, 0.0
  %v1267 = vadd.f32 %v1265, %v1266
  %v1268 = vsel %vm115, %v1244, 0.0
  %v1269 = vadd.f32 %v1267, %v1268
  %v1270 = vsel %vm115, %v1245, 0.0
  %v1271 = vadd.f32 %v1269, %v1270
  %v1272 = vsel %vm115, %v1246, 0.0
  %v1273 = vadd.f32 %v1271, %v1272
  %v1274 = vsel %vm115, %v1247, 0.0
  %v1275 = vadd.f32 %v1273, %v1274
  %v1276 = vsel %vm115, %v1248, 0.0
  %v1277 = vadd.f32 %v1275, %v1276
  %v1278 = vsel %vm115, %v1249, 0.0
  %v1279 = vadd.f32 %v1277, %v1278
  %v1280 = vsel %vm115, %v1250, 0.0
  %v1281 = vadd.f32 %v1279, %v1280
  %v1282 = vrot.slane %v1281, 4
  %v1283 = vadd.f32 %v1281, %v1282
  %v1284 = vrot.slane %v1283, 2
  %v1285 = vadd.f32 %v1283, %v1284
  %v1286 = vrot.slane %v1285, 1
  %v1287 = vadd.f32 %v1285, %v1286
  %1288 = vst.msk [vmem:[%s6] sm:$0x1] %vm1233, %v1287
  // Predicated region
  $region18: #{conv_block_forward.4} parent=0 // pred_check
    _
  $region19: #{conv_block_forward.4} parent=0 // pred_check_branch
    %1290 = sbr.rel (0) target = $region21
  $region20: #{conv_block_forward.4} parent=0 // pred_region
    _
  $region21: #{conv_block_forward.4} parent=0 // pred_fallthru
    _
  // Predicated region
  $region22: #{conv_block_forward.4} parent=0 // pred_check
    _
  $region23: #{conv_block_forward.4} parent=0 // pred_check_branch
    %1292 = sbr.rel (0) target = $region25
  $region24: #{conv_block_forward.4} parent=0 // pred_region
    _
  $region25: #{conv_block_forward.4} parent=0 // pred_fallthru
    _
  // Predicated region
  $region26: #{conv_block_forward.4} parent=0 // pred_check
    _
  $region27: #{conv_block_forward.4} parent=0 // pred_check_branch
    %1294 = sbr.rel (0) target = $region29
  $region28: #{conv_block_forward.4} parent=0 // pred_region
    _
  $region29: #{conv_block_forward.4} parent=0 // pred_fallthru
    _
  // Predicated region
  $region30: #{conv_block_forward.4} parent=0 // pred_check
    _
  $region31: #{conv_block_forward.4} parent=0 // pred_check_branch
    %1296 = sbr.rel (0) target = $region33
  $region32: #{conv_block_forward.4} parent=0 // pred_region
    _
  $region33: #{conv_block_forward.4} parent=0 // pred_fallthru
    _
  // Predicated region
  $region34: #{conv_block_forward.4} parent=0 // pred_check
    _
  $region35: #{conv_block_forward.4} parent=0 // pred_check_branch
    %1298 = sbr.rel (0) target = $region37
  $region36: #{conv_block_forward.4} parent=0 // pred_region
    _
  $region37: #{conv_block_forward.4} parent=0 // pred_fallthru
    _
  // Predicated region
  $region38: #{conv_block_forward.4} parent=0 // pred_check
    _
  $region39: #{conv_block_forward.4} parent=0 // pred_check_branch
    %1300 = sbr.rel (0) target = $region41
  $region40: #{conv_block_forward.4} parent=0 // pred_region
    _
  $region41: #{conv_block_forward.4} parent=0 // pred_fallthru
    _

// kernel: conv_block_forward.3
$region0: #{conv_block_forward.3}
  #allocation0 [shape = 'u32[]', space=smem, size = 0x4, offset = 0x4, fixed_abs, tag = 'smem constant byte address 0x4 - core index']
  #allocation1 [shape = 'u32[144,128]{1,0:T(1,128)}', space=vmem, size = 0x12000, scoped, tag = 'internal scratch']
  #allocation2 [shape = 'f32[2,10,10,64]{3,2,1,0:T(8,128)}', space=vmem, size = 0x28000, scoped, tag = 'scratch operand']
  %s0 = inlined_call_operand.vmem [shape: f32[2,8,8,64], index: 0, kind: input, shape index: {}]
  %s1 = inlined_call_operand.vmem [shape: bf16[3,192,64], index: 1, kind: input, shape index: {}]
  %s2 = inlined_call_operand.vmem [shape: f32[1,64], index: 2, kind: input, shape index: {}]
  %s3 = inlined_call_operand.vmem [shape: f32[1,64], index: 3, kind: input, shape index: {}]
  %s4 = inlined_call_operand.vmem [shape: bf16[2,8,8,64], index: 4, kind: output, shape index: {0}]
  %s5 = inlined_call_operand.vmem [shape: f32[1,1,64], index: 5, kind: output, shape index: {1}]
  %s6 = inlined_call_operand.vmem [shape: f32[1,1,64], index: 6, kind: output, shape index: {2}]
  %7 = xla_tuple %s4, %s5, %s6
  %s8 = sld [smem:[#allocation0]]
  $region42: #{conv_block_forward.3} parent=0
    _
  %s10 = ssub.s32 1, %s8
  %s11 = scalar_select 0, %s10, %s8
  // Predicated region
  $region2: #{conv_block_forward.3} parent=0 // pred_check
    _
  $region3: #{conv_block_forward.3} parent=0 // pred_check_branch
    %13 = sbr.rel (0) target = $region5
  $region4: #{conv_block_forward.3} parent=0 // pred_region
    _
  $region5: #{conv_block_forward.3} parent=0 // pred_fallthru
    _
  // Predicated region
  $region6: #{conv_block_forward.3} parent=0 // pred_check
    _
  $region7: #{conv_block_forward.3} parent=0 // pred_check_branch
    %15 = sbr.rel (0) target = $region9
  $region8: #{conv_block_forward.3} parent=0 // pred_region
    _
  $region9: #{conv_block_forward.3} parent=0 // pred_fallthru
    _
  // Predicated region
  $region10: #{conv_block_forward.3} parent=0 // pred_check
    _
  $region11: #{conv_block_forward.3} parent=0 // pred_check_branch
    %17 = sbr.rel (0) target = $region13
  $region12: #{conv_block_forward.3} parent=0 // pred_region
    _
  $region13: #{conv_block_forward.3} parent=0 // pred_fallthru
    _
  // Predicated region
  $region14: #{conv_block_forward.3} parent=0 // pred_check
    _
  $region15: #{conv_block_forward.3} parent=0 // pred_check_branch
    %19 = sbr.rel (0) target = $region17
  $region16: #{conv_block_forward.3} parent=0 // pred_region
    _
  $region17: #{conv_block_forward.3} parent=0 // pred_fallthru
    _
  %v21 = vld [vmem:[%s0] sm:$0xff]
  %v22 = vld [vmem:[%s0 + $0x8] sm:$0xff]
  %v23 = vld [vmem:[%s0 + $0x10] sm:$0xff]
  %v24 = vld [vmem:[%s0 + $0x18] sm:$0xff]
  %v25 = vld [vmem:[%s0 + $0x20] sm:$0xff]
  %v26 = vld [vmem:[%s0 + $0x28] sm:$0xff]
  %v27 = vld [vmem:[%s0 + $0x30] sm:$0xff]
  %v28 = vld [vmem:[%s0 + $0x38] sm:$0xff]
  %v29 = vld [vmem:[%s0 + $0x40] sm:$0xff]
  %v30 = vld [vmem:[%s0 + $0x48] sm:$0xff]
  %v31 = vld [vmem:[%s0 + $0x50] sm:$0xff]
  %v32 = vld [vmem:[%s0 + $0x58] sm:$0xff]
  %v33 = vld [vmem:[%s0 + $0x60] sm:$0xff]
  %v34 = vld [vmem:[%s0 + $0x68] sm:$0xff]
  %v35 = vld [vmem:[%s0 + $0x70] sm:$0xff]
  %v36 = vld [vmem:[%s0 + $0x78] sm:$0xff]
  %vm37 = vcmask 523264
  %38 = vst.msk [vmem:[#allocation2] sm:$0xff] %vm37, 0.0
  %vm39 = vcmask 517120
  %40 = vst.msk [vmem:[#allocation2 + $0x8] sm:$0x3] %vm39, 0.0
  %41 = vst.msk [vmem:[#allocation2 + $0x10] sm:$0xff] %vm37, 0.0
  %42 = vst.msk [vmem:[#allocation2 + $0x18] sm:$0x3] %vm39, 0.0
  %43 = vst.msk [vmem:[#allocation2 + $0x20] sm:$0xff] %vm37, 0.0
  %44 = vst.msk [vmem:[#allocation2 + $0x28] sm:$0x3] %vm39, 0.0
  %45 = vst.msk [vmem:[#allocation2 + $0x30] sm:$0xff] %vm37, 0.0
  %46 = vst.msk [vmem:[#allocation2 + $0x38] sm:$0x3] %vm39, 0.0
  %47 = vst.msk [vmem:[#allocation2 + $0x40] sm:$0xff] %vm37, 0.0
  %48 = vst.msk [vmem:[#allocation2 + $0x48] sm:$0x3] %vm39, 0.0
  %49 = vst.msk [vmem:[#allocation2 + $0x50] sm:$0xff] %vm37, 0.0
  %50 = vst.msk [vmem:[#allocation2 + $0x58] sm:$0x3] %vm39, 0.0
  %51 = vst.msk [vmem:[#allocation2 + $0x60] sm:$0xff] %vm37, 0.0
  %52 = vst.msk [vmem:[#allocation2 + $0x68] sm:$0x3] %vm39, 0.0
  %53 = vst.msk [vmem:[#allocation2 + $0x70] sm:$0xff] %vm37, 0.0
  %54 = vst.msk [vmem:[#allocation2 + $0x78] sm:$0x3] %vm39, 0.0
  %55 = vst.msk [vmem:[#allocation2 + $0x80] sm:$0xff] %vm37, 0.0
  %56 = vst.msk [vmem:[#allocation2 + $0x88] sm:$0x3] %vm39, 0.0
  %57 = vst.msk [vmem:[#allocation2 + $0x90] sm:$0xff] %vm37, 0.0
  %58 = vst.msk [vmem:[#allocation2 + $0x98] sm:$0x3] %vm39, 0.0
  %59 = vst.msk [vmem:[#allocation2 + $0xa0] sm:$0xff] %vm37, 0.0
  %60 = vst.msk [vmem:[#allocation2 + $0xa8] sm:$0x3] %vm39, 0.0
  %61 = vst.msk [vmem:[#allocation2 + $0xb0] sm:$0xff] %vm37, 0.0
  %62 = vst.msk [vmem:[#allocation2 + $0xb8] sm:$0x3] %vm39, 0.0
  %63 = vst.msk [vmem:[#allocation2 + $0xc0] sm:$0xff] %vm37, 0.0
  %64 = vst.msk [vmem:[#allocation2 + $0xc8] sm:$0x3] %vm39, 0.0
  %65 = vst.msk [vmem:[#allocation2 + $0xd0] sm:$0xff] %vm37, 0.0
  %66 = vst.msk [vmem:[#allocation2 + $0xd8] sm:$0x3] %vm39, 0.0
  %67 = vst.msk [vmem:[#allocation2 + $0xe0] sm:$0xff] %vm37, 0.0
  %68 = vst.msk [vmem:[#allocation2 + $0xe8] sm:$0x3] %vm39, 0.0
  %69 = vst.msk [vmem:[#allocation2 + $0xf0] sm:$0xff] %vm37, 0.0
  %70 = vst.msk [vmem:[#allocation2 + $0xf8] sm:$0x3] %vm39, 0.0
  %71 = vst.msk [vmem:[#allocation2 + $0x100] sm:$0xff] %vm37, 0.0
  %72 = vst.msk [vmem:[#allocation2 + $0x108] sm:$0x3] %vm39, 0.0
  %73 = vst.msk [vmem:[#allocation2 + $0x110] sm:$0xff] %vm37, 0.0
  %74 = vst.msk [vmem:[#allocation2 + $0x118] sm:$0x3] %vm39, 0.0
  %75 = vst.msk [vmem:[#allocation2 + $0x120] sm:$0xff] %vm37, 0.0
  %76 = vst.msk [vmem:[#allocation2 + $0x128] sm:$0x3] %vm39, 0.0
  %77 = vst.msk [vmem:[#allocation2 + $0x130] sm:$0xff] %vm37, 0.0
  %78 = vst.msk [vmem:[#allocation2 + $0x138] sm:$0x3] %vm39, 0.0
  %s79 = scalar_lea.vmem [#allocation2], 16
  %80 = vst.msk [vmem:[%s79 + $0x1] sm:$0xff] %vm37, %v21
  %81 = vst.msk [vmem:[%s79 + $0x11] sm:$0xff] %vm37, %v22
  %82 = vst.msk [vmem:[%s79 + $0x21] sm:$0xff] %vm37, %v23
  %83 = vst.msk [vmem:[%s79 + $0x31] sm:$0xff] %vm37, %v24
  %84 = vst.msk [vmem:[%s79 + $0x41] sm:$0xff] %vm37, %v25
  %85 = vst.msk [vmem:[%s79 + $0x51] sm:$0xff] %vm37, %v26
  %86 = vst.msk [vmem:[%s79 + $0x61] sm:$0xff] %vm37, %v27
  %87 = vst.msk [vmem:[%s79 + $0x71] sm:$0xff] %vm37, %v28
  %88 = vst.msk [vmem:[%s79 + $0xa1] sm:$0xff] %vm37, %v29
  %89 = vst.msk [vmem:[%s79 + $0xb1] sm:$0xff] %vm37, %v30
  %90 = vst.msk [vmem:[%s79 + $0xc1] sm:$0xff] %vm37, %v31
  %91 = vst.msk [vmem:[%s79 + $0xd1] sm:$0xff] %vm37, %v32
  %92 = vst.msk [vmem:[%s79 + $0xe1] sm:$0xff] %vm37, %v33
  %93 = vst.msk [vmem:[%s79 + $0xf1] sm:$0xff] %vm37, %v34
  %94 = vst.msk [vmem:[%s79 + $0x101] sm:$0xff] %vm37, %v35
  %95 = vst.msk [vmem:[%s79 + $0x111] sm:$0xff] %vm37, %v36
  %v96 = vld [vmem:[#allocation2] sm:$0xff]
  %v97 = vld [vmem:[#allocation2 + $0x8] sm:$0x3]
  %v98 = vld [vmem:[#allocation2 + $0x10] sm:$0xff]
  %v99 = vld [vmem:[#allocation2 + $0x18] sm:$0x3]
  %v100 = vld [vmem:[#allocation2 + $0x20] sm:$0xff]
  %v101 = vld [vmem:[#allocation2 + $0x28] sm:$0x3]
  %v102 = vld [vmem:[#allocation2 + $0x30] sm:$0xff]
  %v103 = vld [vmem:[#allocation2 + $0x38] sm:$0x3]
  %v104 = vld [vmem:[#allocation2 + $0x40] sm:$0xff]
  %v105 = vld [vmem:[#allocation2 + $0x48] sm:$0x3]
  %v106 = vld [vmem:[#allocation2 + $0x50] sm:$0xff]
  %v107 = vld [vmem:[#allocation2 + $0x58] sm:$0x3]
  %v108 = vld [vmem:[#allocation2 + $0x60] sm:$0xff]
  %v109 = vld [vmem:[#allocation2 + $0x68] sm:$0x3]
  %v110 = vld [vmem:[#allocation2 + $0x70] sm:$0xff]
  %v111 = vld [vmem:[#allocation2 + $0x78] sm:$0x3]
  %v112 = vld [vmem:[#allocation2 + $0x80] sm:$0xff]
  %v113 = vld [vmem:[#allocation2 + $0x88] sm:$0x3]
  %v114 = vld [vmem:[#allocation2 + $0x90] sm:$0xff]
  %v115 = vld [vmem:[#allocation2 + $0x98] sm:$0x3]
  %v116 = vld [vmem:[#allocation2 + $0xa0] sm:$0xff]
  %v117 = vld [vmem:[#allocation2 + $0xa8] sm:$0x3]
  %v118 = vld [vmem:[#allocation2 + $0xb0] sm:$0xff]
  %v119 = vld [vmem:[#allocation2 + $0xb8] sm:$0x3]
  %v120 = vld [vmem:[#allocation2 + $0xc0] sm:$0xff]
  %v121 = vld [vmem:[#allocation2 + $0xc8] sm:$0x3]
  %v122 = vld [vmem:[#allocation2 + $0xd0] sm:$0xff]
  %v123 = vld [vmem:[#allocation2 + $0xd8] sm:$0x3]
  %v124 = vld [vmem:[#allocation2 + $0xe0] sm:$0xff]
  %v125 = vld [vmem:[#allocation2 + $0xe8] sm:$0x3]
  %v126 = vld [vmem:[#allocation2 + $0xf0] sm:$0xff]
  %v127 = vld [vmem:[#allocation2 + $0xf8] sm:$0x3]
  %v128 = vld [vmem:[#allocation2 + $0x100] sm:$0xff]
  %v129 = vld [vmem:[#allocation2 + $0x108] sm:$0x3]
  %v130 = vld [vmem:[#allocation2 + $0x110] sm:$0xff]
  %v131 = vld [vmem:[#allocation2 + $0x118] sm:$0x3]
  %v132 = vld [vmem:[#allocation2 + $0x120] sm:$0xff]
  %v133 = vld [vmem:[#allocation2 + $0x128] sm:$0x3]
  %v134 = vld [vmem:[#allocation2 + $0x130] sm:$0xff]
  %v135 = vld [vmem:[#allocation2 + $0x138] sm:$0x3]
  %vm168 = vcmask 1046528
  %v169 = vrot.slane %v96, 1
  %v170 = vrot.slane %v97, 1
  %v171 = vsel %vm168, %v169, %v170
  %v172 = vrot.slane %v98, 1
  %v173 = vrot.slane %v99, 1
  %v174 = vsel %vm168, %v172, %v173
  %v175 = vrot.slane %v100, 1
  %v176 = vrot.slane %v101, 1
  %v177 = vsel %vm168, %v175, %v176
  %v178 = vrot.slane %v102, 1
  %v179 = vrot.slane %v103, 1
  %v180 = vsel %vm168, %v178, %v179
  %v181 = vrot.slane %v104, 1
  %v182 = vrot.slane %v105, 1
  %v183 = vsel %vm168, %v181, %v182
  %v184 = vrot.slane %v106, 1
  %v185 = vrot.slane %v107, 1
  %v186 = vsel %vm168, %v184, %v185
  %v187 = vrot.slane %v108, 1
  %v188 = vrot.slane %v109, 1
  %v189 = vsel %vm168, %v187, %v188
  %v190 = vrot.slane %v110, 1
  %v191 = vrot.slane %v111, 1
  %v192 = vsel %vm168, %v190, %v191
  %v193 = vrot.slane %v116, 1
  %v194 = vrot.slane %v117, 1
  %v195 = vsel %vm168, %v193, %v194
  %v196 = vrot.slane %v118, 1
  %v197 = vrot.slane %v119, 1
  %v198 = vsel %vm168, %v196, %v197
  %v199 = vrot.slane %v120, 1
  %v200 = vrot.slane %v121, 1
  %v201 = vsel %vm168, %v199, %v200
  %v202 = vrot.slane %v122, 1
  %v203 = vrot.slane %v123, 1
  %v204 = vsel %vm168, %v202, %v203
  %v205 = vrot.slane %v124, 1
  %v206 = vrot.slane %v125, 1
  %v207 = vsel %vm168, %v205, %v206
  %v208 = vrot.slane %v126, 1
  %v209 = vrot.slane %v127, 1
  %v210 = vsel %vm168, %v208, %v209
  %v211 = vrot.slane %v128, 1
  %v212 = vrot.slane %v129, 1
  %v213 = vsel %vm168, %v211, %v212
  %v214 = vrot.slane %v130, 1
  %v215 = vrot.slane %v131, 1
  %v216 = vsel %vm168, %v214, %v215
  %217 = vrot.lane.b32.xlu0 %v171, 64
  %v218 = vpop.permute.xlu0 %217
  %219 = vrot.lane.b32.xlu0 %v174, 64
  %v220 = vpop.permute.xlu0 %219
  %221 = vrot.lane.b32.xlu0 %v177, 64
  %v222 = vpop.permute.xlu0 %221
  %223 = vrot.lane.b32.xlu0 %v180, 64
  %v224 = vpop.permute.xlu0 %223
  %225 = vrot.lane.b32.xlu0 %v183, 64
  %v226 = vpop.permute.xlu0 %225
  %227 = vrot.lane.b32.xlu0 %v186, 64
  %v228 = vpop.permute.xlu0 %227
  %229 = vrot.lane.b32.xlu0 %v189, 64
  %v230 = vpop.permute.xlu0 %229
  %231 = vrot.lane.b32.xlu0 %v192, 64
  %v232 = vpop.permute.xlu0 %231
  %233 = vrot.lane.b32.xlu0 %v195, 64
  %v234 = vpop.permute.xlu0 %233
  %235 = vrot.lane.b32.xlu0 %v198, 64
  %v236 = vpop.permute.xlu0 %235
  %237 = vrot.lane.b32.xlu0 %v201, 64
  %v238 = vpop.permute.xlu0 %237
  %239 = vrot.lane.b32.xlu0 %v204, 64
  %v240 = vpop.permute.xlu0 %239
  %241 = vrot.lane.b32.xlu0 %v207, 64
  %v242 = vpop.permute.xlu0 %241
  %243 = vrot.lane.b32.xlu0 %v210, 64
  %v244 = vpop.permute.xlu0 %243
  %245 = vrot.lane.b32.xlu0 %v213, 64
  %v246 = vpop.permute.xlu0 %245
  %247 = vrot.lane.b32.xlu0 %v216, 64
  %v248 = vpop.permute.xlu0 %247
  %vm265 = vcmask 1045504
  %v266 = vrot.slane %v96, 2
  %v267 = vrot.slane %v97, 2
  %v268 = vsel %vm265, %v266, %v267
  %v269 = vrot.slane %v98, 2
  %v270 = vrot.slane %v99, 2
  %v271 = vsel %vm265, %v269, %v270
  %v272 = vrot.slane %v100, 2
  %v273 = vrot.slane %v101, 2
  %v274 = vsel %vm265, %v272, %v273
  %v275 = vrot.slane %v102, 2
  %v276 = vrot.slane %v103, 2
  %v277 = vsel %vm265, %v275, %v276
  %v278 = vrot.slane %v104, 2
  %v279 = vrot.slane %v105, 2
  %v280 = vsel %vm265, %v278, %v279
  %v281 = vrot.slane %v106, 2
  %v282 = vrot.slane %v107, 2
  %v283 = vsel %vm265, %v281, %v282
  %v284 = vrot.slane %v108, 2
  %v285 = vrot.slane %v109, 2
  %v286 = vsel %vm265, %v284, %v285
  %v287 = vrot.slane %v110, 2
  %v288 = vrot.slane %v111, 2
  %v289 = vsel %vm265, %v287, %v288
  %v290 = vrot.slane %v116, 2
  %v291 = vrot.slane %v117, 2
  %v292 = vsel %vm265, %v290, %v291
  %v293 = vrot.slane %v118, 2
  %v294 = vrot.slane %v119, 2
  %v295 = vsel %vm265, %v293, %v294
  %v296 = vrot.slane %v120, 2
  %v297 = vrot.slane %v121, 2
  %v298 = vsel %vm265, %v296, %v297
  %v299 = vrot.slane %v122, 2
  %v300 = vrot.slane %v123, 2
  %v301 = vsel %vm265, %v299, %v300
  %v302 = vrot.slane %v124, 2
  %v303 = vrot.slane %v125, 2
  %v304 = vsel %vm265, %v302, %v303
  %v305 = vrot.slane %v126, 2
  %v306 = vrot.slane %v127, 2
  %v307 = vsel %vm265, %v305, %v306
  %v308 = vrot.slane %v128, 2
  %v309 = vrot.slane %v129, 2
  %v310 = vsel %vm265, %v308, %v309
  %v311 = vrot.slane %v130, 2
  %v312 = vrot.slane %v131, 2
  %v313 = vsel %vm265, %v311, %v312
  %v330 = vsel %vm37, %v96, %v218
  %v331 = vsel %vm37, %v98, %v220
  %v332 = vsel %vm37, %v100, %v222
  %v333 = vsel %vm37, %v102, %v224
  %v334 = vsel %vm37, %v104, %v226
  %v335 = vsel %vm37, %v106, %v228
  %v336 = vsel %vm37, %v108, %v230
  %v337 = vsel %vm37, %v110, %v232
  %v338 = vsel %vm37, %v116, %v234
  %v339 = vsel %vm37, %v118, %v236
  %v340 = vsel %vm37, %v120, %v238
  %v341 = vsel %vm37, %v122, %v240
  %v342 = vsel %vm37, %v124, %v242
  %v343 = vsel %vm37, %v126, %v244
  %v344 = vsel %vm37, %v128, %v246
  %v345 = vsel %vm37, %v130, %v248
  %v346 = vpack.c.bf16 %v331, %v330
  %v347 = vpack.c.bf16 %v271, %v268
  %v348 = vpack.c.bf16 %v333, %v332
  %v349 = vpack.c.bf16 %v277, %v274
  %v350 = vpack.c.bf16 %v335, %v334
  %v351 = vpack.c.bf16 %v283, %v280
  %v352 = vpack.c.bf16 %v337, %v336
  %v353 = vpack.c.bf16 %v289, %v286
  %v354 = vpack.c.bf16 %v339, %v338
  %v355 = vpack.c.bf16 %v295, %v292
  %v356 = vpack.c.bf16 %v341, %v340
  %v357 = vpack.c.bf16 %v301, %v298
  %v358 = vpack.c.bf16 %v343, %v342
  %v359 = vpack.c.bf16 %v307, %v304
  %v360 = vpack.c.bf16 %v345, %v344
  %v361 = vpack.c.bf16 %v313, %v310
  %v362 = vld [vmem:[%s1] sm:$0xf]
  %v363 = vld [vmem:[%s1 + $0x4] sm:$0xf]
  %v364 = vld [vmem:[%s1 + $0x8] sm:$0xf]
  %v365 = vld [vmem:[%s1 + $0xc] sm:$0xf]
  %v366 = vld [vmem:[%s1 + $0x10] sm:$0xf]
  %v367 = vld [vmem:[%s1 + $0x14] sm:$0xf]
  %v368 = vld [vmem:[%s1 + $0x18] sm:$0xf]
  %v369 = vld [vmem:[%s1 + $0x1c] sm:$0xf]
  %v370 = vld [vmem:[%s1 + $0x20] sm:$0xf]
  %v371 = vld [vmem:[%s1 + $0x24] sm:$0xf]
  %v372 = vld [vmem:[%s1 + $0x28] sm:$0xf]
  %v373 = vld [vmem:[%s1 + $0x2c] sm:$0xf]
  %v374 = vld [vmem:[%s1 + $0x30] sm:$0xf]
  %v375 = vld [vmem:[%s1 + $0x34] sm:$0xf]
  %v376 = vld [vmem:[%s1 + $0x38] sm:$0xf]
  %v377 = vld [vmem:[%s1 + $0x3c] sm:$0xf]
  %v378 = vld [vmem:[%s1 + $0x40] sm:$0xf]
  %v379 = vld [vmem:[%s1 + $0x44] sm:$0xf]
  %v380 = vld [vmem:[%s1 + $0x48] sm:$0xf]
  %v381 = vld [vmem:[%s1 + $0x4c] sm:$0xf]
  %v382 = vld [vmem:[%s1 + $0x50] sm:$0xf]
  %v383 = vld [vmem:[%s1 + $0x54] sm:$0xf]
  %v384 = vld [vmem:[%s1 + $0x58] sm:$0xf]
  %v385 = vld [vmem:[%s1 + $0x5c] sm:$0xf]
  %v390 = vrot.slane %v112, 1
  %v391 = vrot.slane %v113, 1
  %v392 = vsel %vm168, %v390, %v391
  %v393 = vrot.slane %v132, 1
  %v394 = vrot.slane %v133, 1
  %v395 = vsel %vm168, %v393, %v394
  %396 = vrot.lane.b32.xlu0 %v392, 64
  %v397 = vpop.permute.xlu0 %396
  %398 = vrot.lane.b32.xlu0 %v395, 64
  %v399 = vpop.permute.xlu0 %398
  %v402 = vrot.slane %v112, 2
  %v403 = vrot.slane %v113, 2
  %v404 = vsel %vm265, %v402, %v403
  %v405 = vrot.slane %v132, 2
  %v406 = vrot.slane %v133, 2
  %v407 = vsel %vm265, %v405, %v406
  %v410 = vsel %vm37, %v112, %v397
  %v411 = vsel %vm37, %v132, %v399
  %v412 = vpack.c.bf16 %v332, %v331
  %v413 = vpack.c.bf16 %v274, %v271
  %v414 = vpack.c.bf16 %v334, %v333
  %v415 = vpack.c.bf16 %v280, %v277
  %v416 = vpack.c.bf16 %v336, %v335
  %v417 = vpack.c.bf16 %v286, %v283
  %v418 = vpack.c.bf16 %v410, %v337
  %v419 = vpack.c.bf16 %v404, %v289
  %v420 = vpack.c.bf16 %v340, %v339
  %v421 = vpack.c.bf16 %v298, %v295
  %v422 = vpack.c.bf16 %v342, %v341
  %v423 = vpack.c.bf16 %v304, %v301
  %v424 = vpack.c.bf16 %v344, %v343
  %v425 = vpack.c.bf16 %v310, %v307
  %v426 = vpack.c.bf16 %v411, %v345
  %v427 = vpack.c.bf16 %v407, %v313
  %s428 = scalar_lea.vmem %s1, 96
  %v429 = vld [vmem:[%s428] sm:$0xf]
  %v430 = vld [vmem:[%s428 + $0x4] sm:$0xf]
  %v431 = vld [vmem:[%s428 + $0x8] sm:$0xf]
  %v432 = vld [vmem:[%s428 + $0xc] sm:$0xf]
  %v433 = vld [vmem:[%s428 + $0x10] sm:$0xf]
  %v434 = vld [vmem:[%s428 + $0x14] sm:$0xf]
  %v435 = vld [vmem:[%s428 + $0x18] sm:$0xf]
  %v436 = vld [vmem:[%s428 + $0x1c] sm:$0xf]
  %v437 = vld [vmem:[%s428 + $0x20] sm:$0xf]
  %v438 = vld [vmem:[%s428 + $0x24] sm:$0xf]
  %v439 = vld [vmem:[%s428 + $0x28] sm:$0xf]
  %v440 = vld [vmem:[%s428 + $0x2c] sm:$0xf]
  %v441 = vld [vmem:[%s428 + $0x30] sm:$0xf]
  %v442 = vld [vmem:[%s428 + $0x34] sm:$0xf]
  %v443 = vld [vmem:[%s428 + $0x38] sm:$0xf]
  %v444 = vld [vmem:[%s428 + $0x3c] sm:$0xf]
  %v445 = vld [vmem:[%s428 + $0x40] sm:$0xf]
  %v446 = vld [vmem:[%s428 + $0x44] sm:$0xf]
  %v447 = vld [vmem:[%s428 + $0x48] sm:$0xf]
  %v448 = vld [vmem:[%s428 + $0x4c] sm:$0xf]
  %v449 = vld [vmem:[%s428 + $0x50] sm:$0xf]
  %v450 = vld [vmem:[%s428 + $0x54] sm:$0xf]
  %v451 = vld [vmem:[%s428 + $0x58] sm:$0xf]
  %v452 = vld [vmem:[%s428 + $0x5c] sm:$0xf]
  %v477 = vunpack.c.l.b16 %v429
  %v478 = vunpack.c.l.b16 %v430
  %v479 = vunpack.c.l.b16 %v431
  %v480 = vunpack.c.l.b16 %v432
  %v481 = vunpack.c.l.b16 %v433
  %v482 = vunpack.c.l.b16 %v434
  %v483 = vunpack.c.l.b16 %v435
  %v484 = vunpack.c.l.b16 %v436
  %v485 = vunpack.c.l.b16 %v437
  %v486 = vunpack.c.l.b16 %v438
  %v487 = vunpack.c.l.b16 %v439
  %v488 = vunpack.c.l.b16 %v440
  %v489 = vunpack.c.l.b16 %v441
  %v490 = vunpack.c.l.b16 %v442
  %v491 = vunpack.c.l.b16 %v443
  %v492 = vunpack.c.l.b16 %v444
  %v493 = vunpack.c.l.b16 %v445
  %v494 = vunpack.c.l.b16 %v446
  %v495 = vunpack.c.l.b16 %v447
  %v496 = vunpack.c.l.b16 %v448
  %v497 = vunpack.c.l.b16 %v449
  %v498 = vunpack.c.l.b16 %v450
  %v499 = vunpack.c.l.b16 %v451
  %v500 = vunpack.c.l.b16 %v452
  %v501 = vpack.c.b16 %v478, %v477
  %v502 = vpack.c.b16 %v480, %v479
  %v503 = vpack.c.b16 %v482, %v481
  %v504 = vpack.c.b16 %v484, %v483
  %v505 = vpack.c.b16 %v486, %v485
  %v506 = vpack.c.b16 %v488, %v487
  %v507 = vpack.c.b16 %v490, %v489
  %v508 = vpack.c.b16 %v492, %v491
  %v509 = vpack.c.b16 %v494, %v493
  %v510 = vpack.c.b16 %v496, %v495
  %v511 = vpack.c.b16 %v498, %v497
  %v512 = vpack.c.b16 %v500, %v499
  %v526 = vsel %vm37, %v413, 0
  %v529 = vsel %vm37, %v415, 0
  %v532 = vsel %vm37, %v417, 0
  %v535 = vsel %vm37, %v419, 0
  %v538 = vsel %vm37, %v421, 0
  %v541 = vsel %vm37, %v423, 0
  %v544 = vsel %vm37, %v425, 0
  %v547 = vsel %vm37, %v427, 0
  %549 = vmatprep.subr.bf16.mxu0 0
  %550 = vmatpush1.bf16.msra.mxu0 %v501
  %551 = vmatprep.subr.bf16.mxu0 0
  %552 = vmatpush1.bf16.msra.mxu0 %v502
  %553 = vmatprep.subr.bf16.mxu0 0
  %554 = vmatpush1.bf16.msra.mxu0 %v503
  %555 = vmatprep.subr.bf16.mxu0 0
  %556 = vmatpush1.bf16.msra.mxu0 %v504
  %557 = vmatprep.subr.bf16.mxu0 0
  %558 = vmatpush1.bf16.msra.mxu0 %v505
  %559 = vmatprep.subr.bf16.mxu0 0
  %560 = vmatpush1.bf16.msra.mxu0 %v506
  %561 = vmatprep.subr.bf16.mxu0 0
  %562 = vmatpush1.bf16.msra.mxu0 %v507
  %563 = vmatprep.subr.bf16.mxu0 0
  %564 = vmatpush1.bf16.msra.mxu0 %v508
  %565 = vmatprep.subr.bf16.mxu0 0
  %566 = vmatpush1.bf16.msra.mxu0 %v509
  %567 = vmatprep.subr.bf16.mxu0 0
  %568 = vmatpush1.bf16.msra.mxu0 %v510
  %569 = vmatprep.subr.bf16.mxu0 0
  %570 = vmatpush1.bf16.msra.mxu0 %v511
  %571 = vmatprep.subr.bf16.mxu0 0
  %572 = vmatpush1.bf16.msra.mxu0 %v512
  %573 = vmatprep.subr.bf16.mxu0 0
  %574 = vmatpush1.bf16.msra.mxu0 0
  %575 = vmatprep.subr.bf16.mxu0 0
  %576 = vmatpush1.bf16.msra.mxu0 0
  %577 = vmatprep.subr.bf16.mxu0 0
  %578 = vmatpush1.bf16.msra.mxu0 0
  %579 = vmatprep.subr.bf16.mxu0 0
  %580 = vmatpush1.bf16.msra.mxu0 0
  %581 = vmatprep.mubr.bf16.mxu0 %v526
  %582 = vmatmul.mubr.bf16.gmra.mrb[0].mxu0 %v412
  %v583 = vpop.f32.mrb[0].mxu0
  %v584 = vadd.f32 0.0, %v583
  %v585 = vpop.f32.mrb[0].mxu0
  %v586 = vpop.f32.mrb[0].mxu0
  %v587 = vadd.f32 0.0, %v586
  %v588 = vpop.f32.mrb[0].mxu0
  %589 = vmatprep.mubr.bf16.mxu0 %v529
  %590 = vmatmul.mubr.bf16.gmra.mrb[0].mxu0 %v414
  %v591 = vpop.f32.mrb[0].mxu0
  %v592 = vadd.f32 0.0, %v591
  %v593 = vpop.f32.mrb[0].mxu0
  %v594 = vpop.f32.mrb[0].mxu0
  %v595 = vadd.f32 0.0, %v594
  %v596 = vpop.f32.mrb[0].mxu0
  %597 = vmatprep.mubr.bf16.mxu0 %v532
  %598 = vmatmul.mubr.bf16.gmra.mrb[0].mxu0 %v416
  %v599 = vpop.f32.mrb[0].mxu0
  %v600 = vadd.f32 0.0, %v599
  %v601 = vpop.f32.mrb[0].mxu0
  %v602 = vpop.f32.mrb[0].mxu0
  %v603 = vadd.f32 0.0, %v602
  %v604 = vpop.f32.mrb[0].mxu0
  %605 = vmatprep.mubr.bf16.mxu0 %v535
  %606 = vmatmul.mubr.bf16.gmra.mrb[0].mxu0 %v418
  %v607 = vpop.f32.mrb[0].mxu0
  %v608 = vadd.f32 0.0, %v607
  %v609 = vpop.f32.mrb[0].mxu0
  %v610 = vpop.f32.mrb[0].mxu0
  %v611 = vadd.f32 0.0, %v610
  %v612 = vpop.f32.mrb[0].mxu0
  %613 = vmatprep.mubr.bf16.mxu0 %v538
  %614 = vmatmul.mubr.bf16.gmra.mrb[0].mxu0 %v420
  %v615 = vpop.f32.mrb[0].mxu0
  %v616 = vadd.f32 0.0, %v615
  %v617 = vpop.f32.mrb[0].mxu0
  %v618 = vpop.f32.mrb[0].mxu0
  %v619 = vadd.f32 0.0, %v618
  %v620 = vpop.f32.mrb[0].mxu0
  %621 = vmatprep.mubr.bf16.mxu0 %v541
  %622 = vmatmul.mubr.bf16.gmra.mrb[0].mxu0 %v422
  %v623 = vpop.f32.mrb[0].mxu0
  %v624 = vadd.f32 0.0, %v623
  %v625 = vpop.f32.mrb[0].mxu0
  %v626 = vpop.f32.mrb[0].mxu0
  %v627 = vadd.f32 0.0, %v626
  %v628 = vpop.f32.mrb[0].mxu0
  %629 = vmatprep.mubr.bf16.mxu0 %v544
  %630 = vmatmul.mubr.bf16.gmra.mrb[0].mxu0 %v424
  %v631 = vpop.f32.mrb[0].mxu0
  %v632 = vadd.f32 0.0, %v631
  %v633 = vpop.f32.mrb[0].mxu0
  %v634 = vpop.f32.mrb[0].mxu0
  %v635 = vadd.f32 0.0, %v634
  %v636 = vpop.f32.mrb[0].mxu0
  %637 = vmatprep.mubr.bf16.mxu0 %v547
  %638 = vmatmul.mubr.bf16.gmra.mrb[0].mxu0 %v426
  %v639 = vpop.f32.mrb[0].mxu0
  %v640 = vadd.f32 0.0, %v639
  %v641 = vpop.f32.mrb[0].mxu0
  %v642 = vpop.f32.mrb[0].mxu0
  %v643 = vadd.f32 0.0, %v642
  %v644 = vpop.f32.mrb[0].mxu0
  %645 = vdwg.mxu0
  %v670 = vunpack.c.l.b16 %v362
  %v671 = vunpack.c.l.b16 %v363
  %v672 = vunpack.c.l.b16 %v364
  %v673 = vunpack.c.l.b16 %v365
  %v674 = vunpack.c.l.b16 %v366
  %v675 = vunpack.c.l.b16 %v367
  %v676 = vunpack.c.l.b16 %v368
  %v677 = vunpack.c.l.b16 %v369
  %v678 = vunpack.c.l.b16 %v370
  %v679 = vunpack.c.l.b16 %v371
  %v680 = vunpack.c.l.b16 %v372
  %v681 = vunpack.c.l.b16 %v373
  %v682 = vunpack.c.l.b16 %v374
  %v683 = vunpack.c.l.b16 %v375
  %v684 = vunpack.c.l.b16 %v376
  %v685 = vunpack.c.l.b16 %v377
  %v686 = vunpack.c.l.b16 %v378
  %v687 = vunpack.c.l.b16 %v379
  %v688 = vunpack.c.l.b16 %v380
  %v689 = vunpack.c.l.b16 %v381
  %v690 = vunpack.c.l.b16 %v382
  %v691 = vunpack.c.l.b16 %v383
  %v692 = vunpack.c.l.b16 %v384
  %v693 = vunpack.c.l.b16 %v385
  %v694 = vpack.c.b16 %v671, %v670
  %v695 = vpack.c.b16 %v673, %v672
  %v696 = vpack.c.b16 %v675, %v674
  %v697 = vpack.c.b16 %v677, %v676
  %v698 = vpack.c.b16 %v679, %v678
  %v699 = vpack.c.b16 %v681, %v680
  %v700 = vpack.c.b16 %v683, %v682
  %v701 = vpack.c.b16 %v685, %v684
  %v702 = vpack.c.b16 %v687, %v686
  %v703 = vpack.c.b16 %v689, %v688
  %v704 = vpack.c.b16 %v691, %v690
  %v705 = vpack.c.b16 %v693, %v692
  %v719 = vsel %vm37, %v347, 0
  %v722 = vsel %vm37, %v349, 0
  %v725 = vsel %vm37, %v351, 0
  %v728 = vsel %vm37, %v353, 0
  %v731 = vsel %vm37, %v355, 0
  %v734 = vsel %vm37, %v357, 0
  %v737 = vsel %vm37, %v359, 0
  %v740 = vsel %vm37, %v361, 0
  %742 = vmatprep.subr.bf16.mxu0 0
  %743 = vmatpush1.bf16.msra.mxu0 %v694
  %744 = vmatprep.subr.bf16.mxu0 0
  %745 = vmatpush1.bf16.msra.mxu0 %v695
  %746 = vmatprep.subr.bf16.mxu0 0
  %747 = vmatpush1.bf16.msra.mxu0 %v696
  %748 = vmatprep.subr.bf16.mxu0 0
  %749 = vmatpush1.bf16.msra.mxu0 %v697
  %750 = vmatprep.subr.bf16.mxu0 0
  %751 = vmatpush1.bf16.msra.mxu0 %v698
  %752 = vmatprep.subr.bf16.mxu0 0
  %753 = vmatpush1.bf16.msra.mxu0 %v699
  %754 = vmatprep.subr.bf16.mxu0 0
  %755 = vmatpush1.bf16.msra.mxu0 %v700
  %756 = vmatprep.subr.bf16.mxu0 0
  %757 = vmatpush1.bf16.msra.mxu0 %v701
  %758 = vmatprep.subr.bf16.mxu0 0
  %759 = vmatpush1.bf16.msra.mxu0 %v702
  %760 = vmatprep.subr.bf16.mxu0 0
  %761 = vmatpush1.bf16.msra.mxu0 %v703
  %762 = vmatprep.subr.bf16.mxu0 0
  %763 = vmatpush1.bf16.msra.mxu0 %v704
  %764 = vmatprep.subr.bf16.mxu0 0
  %765 = vmatpush1.bf16.msra.mxu0 %v705
  %766 = vmatprep.subr.bf16.mxu0 0
  %767 = vmatpush1.bf16.msra.mxu0 0
  %768 = vmatprep.subr.bf16.mxu0 0
  %769 = vmatpush1.bf16.msra.mxu0 0
  %770 = vmatprep.subr.bf16.mxu0 0
  %771 = vmatpush1.bf16.msra.mxu0 0
  %772 = vmatprep.subr.bf16.mxu0 0
  %773 = vmatpush1.bf16.msra.mxu0 0
  %774 = vmatprep.mubr.bf16.mxu0 %v719
  %775 = vmatmul.mubr.bf16.gmra.mrb[0].mxu0 %v346
  %v776 = vpop.f32.mrb[0].mxu0
  %v777 = vadd.f32 %v584, %v776
  %v778 = vpop.f32.mrb[0].mxu0
  %v779 = vpop.f32.mrb[0].mxu0
  %v780 = vadd.f32 %v587, %v779
  %v781 = vpop.f32.mrb[0].mxu0
  %782 = vmatprep.mubr.bf16.mxu0 %v722
  %783 = vmatmul.mubr.bf16.gmra.mrb[0].mxu0 %v348
  %v784 = vpop.f32.mrb[0].mxu0
  %v785 = vadd.f32 %v592, %v784
  %v786 = vpop.f32.mrb[0].mxu0
  %v787 = vpop.f32.mrb[0].mxu0
  %v788 = vadd.f32 %v595, %v787
  %v789 = vpop.f32.mrb[0].mxu0
  %790 = vmatprep.mubr.bf16.mxu0 %v725
  %791 = vmatmul.mubr.bf16.gmra.mrb[0].mxu0 %v350
  %v792 = vpop.f32.mrb[0].mxu0
  %v793 = vadd.f32 %v600, %v792
  %v794 = vpop.f32.mrb[0].mxu0
  %v795 = vpop.f32.mrb[0].mxu0
  %v796 = vadd.f32 %v603, %v795
  %v797 = vpop.f32.mrb[0].mxu0
  %798 = vmatprep.mubr.bf16.mxu0 %v728
  %799 = vmatmul.mubr.bf16.gmra.mrb[0].mxu0 %v352
  %v800 = vpop.f32.mrb[0].mxu0
  %v801 = vadd.f32 %v608, %v800
  %v802 = vpop.f32.mrb[0].mxu0
  %v803 = vpop.f32.mrb[0].mxu0
  %v804 = vadd.f32 %v611, %v803
  %v805 = vpop.f32.mrb[0].mxu0
  %806 = vmatprep.mubr.bf16.mxu0 %v731
  %807 = vmatmul.mubr.bf16.gmra.mrb[0].mxu0 %v354
  %v808 = vpop.f32.mrb[0].mxu0
  %v809 = vadd.f32 %v616, %v808
  %v810 = vpop.f32.mrb[0].mxu0
  %v811 = vpop.f32.mrb[0].mxu0
  %v812 = vadd.f32 %v619, %v811
  %v813 = vpop.f32.mrb[0].mxu0
  %814 = vmatprep.mubr.bf16.mxu0 %v734
  %815 = vmatmul.mubr.bf16.gmra.mrb[0].mxu0 %v356
  %v816 = vpop.f32.mrb[0].mxu0
  %v817 = vadd.f32 %v624, %v816
  %v818 = vpop.f32.mrb[0].mxu0
  %v819 = vpop.f32.mrb[0].mxu0
  %v820 = vadd.f32 %v627, %v819
  %v821 = vpop.f32.mrb[0].mxu0
  %822 = vmatprep.mubr.bf16.mxu0 %v737
  %823 = vmatmul.mubr.bf16.gmra.mrb[0].mxu0 %v358
  %v824 = vpop.f32.mrb[0].mxu0
  %v825 = vadd.f32 %v632, %v824
  %v826 = vpop.f32.mrb[0].mxu0
  %v827 = vpop.f32.mrb[0].mxu0
  %v828 = vadd.f32 %v635, %v827
  %v829 = vpop.f32.mrb[0].mxu0
  %830 = vmatprep.mubr.bf16.mxu0 %v740
  %831 = vmatmul.mubr.bf16.gmra.mrb[0].mxu0 %v360
  %v832 = vpop.f32.mrb[0].mxu0
  %v833 = vadd.f32 %v640, %v832
  %v834 = vpop.f32.mrb[0].mxu0
  %v835 = vpop.f32.mrb[0].mxu0
  %v836 = vadd.f32 %v643, %v835
  %v837 = vpop.f32.mrb[0].mxu0
  %838 = vdwg.mxu0
  %v843 = vrot.slane %v114, 1
  %v844 = vrot.slane %v115, 1
  %v845 = vsel %vm168, %v843, %v844
  %v846 = vrot.slane %v134, 1
  %v847 = vrot.slane %v135, 1
  %v848 = vsel %vm168, %v846, %v847
  %849 = vrot.lane.b32.xlu0 %v845, 64
  %v850 = vpop.permute.xlu0 %849
  %851 = vrot.lane.b32.xlu0 %v848, 64
  %v852 = vpop.permute.xlu0 %851
  %v855 = vrot.slane %v114, 2
  %v856 = vrot.slane %v115, 2
  %v857 = vsel %vm265, %v855, %v856
  %v858 = vrot.slane %v134, 2
  %v859 = vrot.slane %v135, 2
  %v860 = vsel %vm265, %v858, %v859
  %v863 = vsel %vm37, %v114, %v850
  %v864 = vsel %vm37, %v134, %v852
  %v865 = vpack.c.bf16 %v863, %v410
  %v866 = vpack.c.bf16 %v857, %v404
  %v867 = vpack.c.bf16 %v864, %v411
  %v868 = vpack.c.bf16 %v860, %v407
  %s869 = scalar_lea.vmem %s1, 192
  %v870 = vld [vmem:[%s869] sm:$0xf]
  %v871 = vld [vmem:[%s869 + $0x4] sm:$0xf]
  %v872 = vld [vmem:[%s869 + $0x8] sm:$0xf]
  %v873 = vld [vmem:[%s869 + $0xc] sm:$0xf]
  %v874 = vld [vmem:[%s869 + $0x10] sm:$0xf]
  %v875 = vld [vmem:[%s869 + $0x14] sm:$0xf]
  %v876 = vld [vmem:[%s869 + $0x18] sm:$0xf]
  %v877 = vld [vmem:[%s869 + $0x1c] sm:$0xf]
  %v878 = vld [vmem:[%s869 + $0x20] sm:$0xf]
  %v879 = vld [vmem:[%s869 + $0x24] sm:$0xf]
  %v880 = vld [vmem:[%s869 + $0x28] sm:$0xf]
  %v881 = vld [vmem:[%s869 + $0x2c] sm:$0xf]
  %v882 = vld [vmem:[%s869 + $0x30] sm:$0xf]
  %v883 = vld [vmem:[%s869 + $0x34] sm:$0xf]
  %v884 = vld [vmem:[%s869 + $0x38] sm:$0xf]
  %v885 = vld [vmem:[%s869 + $0x3c] sm:$0xf]
  %v886 = vld [vmem:[%s869 + $0x40] sm:$0xf]
  %v887 = vld [vmem:[%s869 + $0x44] sm:$0xf]
  %v888 = vld [vmem:[%s869 + $0x48] sm:$0xf]
  %v889 = vld [vmem:[%s869 + $0x4c] sm:$0xf]
  %v890 = vld [vmem:[%s869 + $0x50] sm:$0xf]
  %v891 = vld [vmem:[%s869 + $0x54] sm:$0xf]
  %v892 = vld [vmem:[%s869 + $0x58] sm:$0xf]
  %v893 = vld [vmem:[%s869 + $0x5c] sm:$0xf]
  %v918 = vunpack.c.l.b16 %v870
  %v919 = vunpack.c.l.b16 %v871
  %v920 = vunpack.c.l.b16 %v872
  %v921 = vunpack.c.l.b16 %v873
  %v922 = vunpack.c.l.b16 %v874
  %v923 = vunpack.c.l.b16 %v875
  %v924 = vunpack.c.l.b16 %v876
  %v925 = vunpack.c.l.b16 %v877
  %v926 = vunpack.c.l.b16 %v878
  %v927 = vunpack.c.l.b16 %v879
  %v928 = vunpack.c.l.b16 %v880
  %v929 = vunpack.c.l.b16 %v881
  %v930 = vunpack.c.l.b16 %v882
  %v931 = vunpack.c.l.b16 %v883
  %v932 = vunpack.c.l.b16 %v884
  %v933 = vunpack.c.l.b16 %v885
  %v934 = vunpack.c.l.b16 %v886
  %v935 = vunpack.c.l.b16 %v887
  %v936 = vunpack.c.l.b16 %v888
  %v937 = vunpack.c.l.b16 %v889
  %v938 = vunpack.c.l.b16 %v890
  %v939 = vunpack.c.l.b16 %v891
  %v940 = vunpack.c.l.b16 %v892
  %v941 = vunpack.c.l.b16 %v893
  %v942 = vpack.c.b16 %v919, %v918
  %v943 = vpack.c.b16 %v921, %v920
  %v944 = vpack.c.b16 %v923, %v922
  %v945 = vpack.c.b16 %v925, %v924
  %v946 = vpack.c.b16 %v927, %v926
  %v947 = vpack.c.b16 %v929, %v928
  %v948 = vpack.c.b16 %v931, %v930
  %v949 = vpack.c.b16 %v933, %v932
  %v950 = vpack.c.b16 %v935, %v934
  %v951 = vpack.c.b16 %v937, %v936
  %v952 = vpack.c.b16 %v939, %v938
  %v953 = vpack.c.b16 %v941, %v940
  %v967 = vsel %vm37, %v866, 0
  %v970 = vsel %vm37, %v868, 0
  %972 = vmatprep.subr.bf16.mxu0 0
  %973 = vmatpush1.bf16.msra.mxu0 %v942
  %974 = vmatprep.subr.bf16.mxu0 0
  %975 = vmatpush1.bf16.msra.mxu0 %v943
  %976 = vmatprep.subr.bf16.mxu0 0
  %977 = vmatpush1.bf16.msra.mxu0 %v944
  %978 = vmatprep.subr.bf16.mxu0 0
  %979 = vmatpush1.bf16.msra.mxu0 %v945
  %980 = vmatprep.subr.bf16.mxu0 0
  %981 = vmatpush1.bf16.msra.mxu0 %v946
  %982 = vmatprep.subr.bf16.mxu0 0
  %983 = vmatpush1.bf16.msra.mxu0 %v947
  %984 = vmatprep.subr.bf16.mxu0 0
  %985 = vmatpush1.bf16.msra.mxu0 %v948
  %986 = vmatprep.subr.bf16.mxu0 0
  %987 = vmatpush1.bf16.msra.mxu0 %v949
  %988 = vmatprep.subr.bf16.mxu0 0
  %989 = vmatpush1.bf16.msra.mxu0 %v950
  %990 = vmatprep.subr.bf16.mxu0 0
  %991 = vmatpush1.bf16.msra.mxu0 %v951
  %992 = vmatprep.subr.bf16.mxu0 0
  %993 = vmatpush1.bf16.msra.mxu0 %v952
  %994 = vmatprep.subr.bf16.mxu0 0
  %995 = vmatpush1.bf16.msra.mxu0 %v953
  %996 = vmatprep.subr.bf16.mxu0 0
  %997 = vmatpush1.bf16.msra.mxu0 0
  %998 = vmatprep.subr.bf16.mxu0 0
  %999 = vmatpush1.bf16.msra.mxu0 0
  %1000 = vmatprep.subr.bf16.mxu0 0
  %1001 = vmatpush1.bf16.msra.mxu0 0
  %1002 = vmatprep.subr.bf16.mxu0 0
  %1003 = vmatpush1.bf16.msra.mxu0 0
  %1004 = vmatprep.mubr.bf16.mxu0 %v722
  %1005 = vmatmul.mubr.bf16.gmra.mrb[0].mxu0 %v348
  %v1006 = vpop.f32.mrb[0].mxu0
  %v1007 = vadd.f32 0.0, %v1006
  %v1008 = vpop.f32.mrb[0].mxu0
  %v1009 = vpop.f32.mrb[0].mxu0
  %v1010 = vadd.f32 0.0, %v1009
  %v1011 = vpop.f32.mrb[0].mxu0
  %1012 = vmatprep.mubr.bf16.mxu0 %v725
  %1013 = vmatmul.mubr.bf16.gmra.mrb[0].mxu0 %v350
  %v1014 = vpop.f32.mrb[0].mxu0
  %v1015 = vadd.f32 0.0, %v1014
  %v1016 = vpop.f32.mrb[0].mxu0
  %v1017 = vpop.f32.mrb[0].mxu0
  %v1018 = vadd.f32 0.0, %v1017
  %v1019 = vpop.f32.mrb[0].mxu0
  %1020 = vmatprep.mubr.bf16.mxu0 %v728
  %1021 = vmatmul.mubr.bf16.gmra.mrb[0].mxu0 %v352
  %v1022 = vpop.f32.mrb[0].mxu0
  %v1023 = vadd.f32 0.0, %v1022
  %v1024 = vpop.f32.mrb[0].mxu0
  %v1025 = vpop.f32.mrb[0].mxu0
  %v1026 = vadd.f32 0.0, %v1025
  %v1027 = vpop.f32.mrb[0].mxu0
  %1028 = vmatprep.mubr.bf16.mxu0 %v967
  %1029 = vmatmul.mubr.bf16.gmra.mrb[0].mxu0 %v865
  %v1030 = vpop.f32.mrb[0].mxu0
  %v1031 = vadd.f32 0.0, %v1030
  %v1032 = vpop.f32.mrb[0].mxu0
  %v1033 = vpop.f32.mrb[0].mxu0
  %v1034 = vadd.f32 0.0, %v1033
  %v1035 = vpop.f32.mrb[0].mxu0
  %1036 = vmatprep.mubr.bf16.mxu0 %v734
  %1037 = vmatmul.mubr.bf16.gmra.mrb[0].mxu0 %v356
  %v1038 = vpop.f32.mrb[0].mxu0
  %v1039 = vadd.f32 0.0, %v1038
  %v1040 = vpop.f32.mrb[0].mxu0
  %v1041 = vpop.f32.mrb[0].mxu0
  %v1042 = vadd.f32 0.0, %v1041
  %v1043 = vpop.f32.mrb[0].mxu0
  %1044 = vmatprep.mubr.bf16.mxu0 %v737
  %1045 = vmatmul.mubr.bf16.gmra.mrb[0].mxu0 %v358
  %v1046 = vpop.f32.mrb[0].mxu0
  %v1047 = vadd.f32 0.0, %v1046
  %v1048 = vpop.f32.mrb[0].mxu0
  %v1049 = vpop.f32.mrb[0].mxu0
  %v1050 = vadd.f32 0.0, %v1049
  %v1051 = vpop.f32.mrb[0].mxu0
  %1052 = vmatprep.mubr.bf16.mxu0 %v740
  %1053 = vmatmul.mubr.bf16.gmra.mrb[0].mxu0 %v360
  %v1054 = vpop.f32.mrb[0].mxu0
  %v1055 = vadd.f32 0.0, %v1054
  %v1056 = vpop.f32.mrb[0].mxu0
  %v1057 = vpop.f32.mrb[0].mxu0
  %v1058 = vadd.f32 0.0, %v1057
  %v1059 = vpop.f32.mrb[0].mxu0
  %1060 = vmatprep.mubr.bf16.mxu0 %v970
  %1061 = vmatmul.mubr.bf16.gmra.mrb[0].mxu0 %v867
  %v1062 = vpop.f32.mrb[0].mxu0
  %v1063 = vadd.f32 0.0, %v1062
  %v1064 = vpop.f32.mrb[0].mxu0
  %v1065 = vpop.f32.mrb[0].mxu0
  %v1066 = vadd.f32 0.0, %v1065
  %v1067 = vpop.f32.mrb[0].mxu0
  %1068 = vdwg.mxu0
  %v1069 = vadd.f32 %v777, %v1007
  %v1070 = vadd.f32 %v780, %v1010
  %v1071 = vadd.f32 %v785, %v1015
  %v1072 = vadd.f32 %v788, %v1018
  %v1073 = vadd.f32 %v793, %v1023
  %v1074 = vadd.f32 %v796, %v1026
  %v1075 = vadd.f32 %v801, %v1031
  %v1076 = vadd.f32 %v804, %v1034
  %v1077 = vadd.f32 %v809, %v1039
  %v1078 = vadd.f32 %v812, %v1042
  %v1079 = vadd.f32 %v817, %v1047
  %v1080 = vadd.f32 %v820, %v1050
  %v1081 = vadd.f32 %v825, %v1055
  %v1082 = vadd.f32 %v828, %v1058
  %v1083 = vadd.f32 %v833, %v1063
  %v1084 = vadd.f32 %v836, %v1066
  %v1085 = vpack.c.bf16 %v1069, %v1069
  %v1086 = vpack.c.bf16 %v1070, %v1070
  %v1087 = vpack.c.bf16 %v1071, %v1071
  %v1088 = vpack.c.bf16 %v1072, %v1072
  %v1089 = vpack.c.bf16 %v1073, %v1073
  %v1090 = vpack.c.bf16 %v1074, %v1074
  %v1091 = vpack.c.bf16 %v1075, %v1075
  %v1092 = vpack.c.bf16 %v1076, %v1076
  %v1093 = vpack.c.bf16 %v1077, %v1077
  %v1094 = vpack.c.bf16 %v1078, %v1078
  %v1095 = vpack.c.bf16 %v1079, %v1079
  %v1096 = vpack.c.bf16 %v1080, %v1080
  %v1097 = vpack.c.bf16 %v1081, %v1081
  %v1098 = vpack.c.bf16 %v1082, %v1082
  %v1099 = vpack.c.bf16 %v1083, %v1083
  %v1100 = vpack.c.bf16 %v1084, %v1084
  %vm1101 = vcmask 519168
  %1102 = vst.msk [vmem:[%s4] sm:$0xf] %vm1101, %v1085
  %1103 = vst.msk [vmem:[%s4 + $0x4] sm:$0xf] %vm1101, %v1086
  %1104 = vst.msk [vmem:[%s4 + $0x8] sm:$0xf] %vm1101, %v1087
  %1105 = vst.msk [vmem:[%s4 + $0xc] sm:$0xf] %vm1101, %v1088
  %1106 = vst.msk [vmem:[%s4 + $0x10] sm:$0xf] %vm1101, %v1089
  %1107 = vst.msk [vmem:[%s4 + $0x14] sm:$0xf] %vm1101, %v1090
  %1108 = vst.msk [vmem:[%s4 + $0x18] sm:$0xf] %vm1101, %v1091
  %1109 = vst.msk [vmem:[%s4 + $0x1c] sm:$0xf] %vm1101, %v1092
  %1110 = vst.msk [vmem:[%s4 + $0x20] sm:$0xf] %vm1101, %v1093
  %1111 = vst.msk [vmem:[%s4 + $0x24] sm:$0xf] %vm1101, %v1094
  %1112 = vst.msk [vmem:[%s4 + $0x28] sm:$0xf] %vm1101, %v1095
  %1113 = vst.msk [vmem:[%s4 + $0x2c] sm:$0xf] %vm1101, %v1096
  %1114 = vst.msk [vmem:[%s4 + $0x30] sm:$0xf] %vm1101, %v1097
  %1115 = vst.msk [vmem:[%s4 + $0x34] sm:$0xf] %vm1101, %v1098
  %1116 = vst.msk [vmem:[%s4 + $0x38] sm:$0xf] %vm1101, %v1099
  %1117 = vst.msk [vmem:[%s4 + $0x3c] sm:$0xf] %vm1101, %v1100
  %v1118 = vsel %vm37, %v1069, 0.0
  %v1119 = vsel %vm37, %v1070, 0.0
  %v1120 = vadd.f32 %v1118, %v1119
  %v1121 = vsel %vm37, %v1071, 0.0
  %v1122 = vadd.f32 %v1120, %v1121
  %v1123 = vsel %vm37, %v1072, 0.0
  %v1124 = vadd.f32 %v1122, %v1123
  %v1125 = vsel %vm37, %v1073, 0.0
  %v1126 = vadd.f32 %v1124, %v1125
  %v1127 = vsel %vm37, %v1074, 0.0
  %v1128 = vadd.f32 %v1126, %v1127
  %v1129 = vsel %vm37, %v1075, 0.0
  %v1130 = vadd.f32 %v1128, %v1129
  %v1131 = vsel %vm37, %v1076, 0.0
  %v1132 = vadd.f32 %v1130, %v1131
  %v1133 = vsel %vm37, %v1077, 0.0
  %v1134 = vadd.f32 %v1132, %v1133
  %v1135 = vsel %vm37, %v1078, 0.0
  %v1136 = vadd.f32 %v1134, %v1135
  %v1137 = vsel %vm37, %v1079, 0.0
  %v1138 = vadd.f32 %v1136, %v1137
  %v1139 = vsel %vm37, %v1080, 0.0
  %v1140 = vadd.f32 %v1138, %v1139
  %v1141 = vsel %vm37, %v1081, 0.0
  %v1142 = vadd.f32 %v1140, %v1141
  %v1143 = vsel %vm37, %v1082, 0.0
  %v1144 = vadd.f32 %v1142, %v1143
  %v1145 = vsel %vm37, %v1083, 0.0
  %v1146 = vadd.f32 %v1144, %v1145
  %v1147 = vsel %vm37, %v1084, 0.0
  %v1148 = vadd.f32 %v1146, %v1147
  %v1149 = vrot.slane %v1148, 4
  %v1150 = vadd.f32 %v1148, %v1149
  %v1151 = vrot.slane %v1150, 2
  %v1152 = vadd.f32 %v1150, %v1151
  %v1153 = vrot.slane %v1152, 1
  %v1154 = vadd.f32 %v1152, %v1153
  %vm1155 = vcmask 516096
  %1156 = vst.msk [vmem:[%s5] sm:$0x1] %vm1155, %v1154
  %v1157 = vmul.f32 %v1069, %v1069
  %v1158 = vmul.f32 %v1070, %v1070
  %v1159 = vmul.f32 %v1071, %v1071
  %v1160 = vmul.f32 %v1072, %v1072
  %v1161 = vmul.f32 %v1073, %v1073
  %v1162 = vmul.f32 %v1074, %v1074
  %v1163 = vmul.f32 %v1075, %v1075
  %v1164 = vmul.f32 %v1076, %v1076
  %v1165 = vmul.f32 %v1077, %v1077
  %v1166 = vmul.f32 %v1078, %v1078
  %v1167 = vmul.f32 %v1079, %v1079
  %v1168 = vmul.f32 %v1080, %v1080
  %v1169 = vmul.f32 %v1081, %v1081
  %v1170 = vmul.f32 %v1082, %v1082
  %v1171 = vmul.f32 %v1083, %v1083
  %v1172 = vmul.f32 %v1084, %v1084
  %v1173 = vsel %vm37, %v1157, 0.0
  %v1174 = vsel %vm37, %v1158, 0.0
  %v1175 = vadd.f32 %v1173, %v1174
  %v1176 = vsel %vm37, %v1159, 0.0
  %v1177 = vadd.f32 %v1175, %v1176
  %v1178 = vsel %vm37, %v1160, 0.0
  %v1179 = vadd.f32 %v1177, %v1178
  %v1180 = vsel %vm37, %v1161, 0.0
  %v1181 = vadd.f32 %v1179, %v1180
  %v1182 = vsel %vm37, %v1162, 0.0
  %v1183 = vadd.f32 %v1181, %v1182
  %v1184 = vsel %vm37, %v1163, 0.0
  %v1185 = vadd.f32 %v1183, %v1184
  %v1186 = vsel %vm37, %v1164, 0.0
  %v1187 = vadd.f32 %v1185, %v1186
  %v1188 = vsel %vm37, %v1165, 0.0
  %v1189 = vadd.f32 %v1187, %v1188
  %v1190 = vsel %vm37, %v1166, 0.0
  %v1191 = vadd.f32 %v1189, %v1190
  %v1192 = vsel %vm37, %v1167, 0.0
  %v1193 = vadd.f32 %v1191, %v1192
  %v1194 = vsel %vm37, %v1168, 0.0
  %v1195 = vadd.f32 %v1193, %v1194
  %v1196 = vsel %vm37, %v1169, 0.0
  %v1197 = vadd.f32 %v1195, %v1196
  %v1198 = vsel %vm37, %v1170, 0.0
  %v1199 = vadd.f32 %v1197, %v1198
  %v1200 = vsel %vm37, %v1171, 0.0
  %v1201 = vadd.f32 %v1199, %v1200
  %v1202 = vsel %vm37, %v1172, 0.0
  %v1203 = vadd.f32 %v1201, %v1202
  %v1204 = vrot.slane %v1203, 4
  %v1205 = vadd.f32 %v1203, %v1204
  %v1206 = vrot.slane %v1205, 2
  %v1207 = vadd.f32 %v1205, %v1206
  %v1208 = vrot.slane %v1207, 1
  %v1209 = vadd.f32 %v1207, %v1208
  %1210 = vst.msk [vmem:[%s6] sm:$0x1] %vm1155, %v1209
  // Predicated region
  $region18: #{conv_block_forward.3} parent=0 // pred_check
    _
  $region19: #{conv_block_forward.3} parent=0 // pred_check_branch
    %1212 = sbr.rel (0) target = $region21
  $region20: #{conv_block_forward.3} parent=0 // pred_region
    _
  $region21: #{conv_block_forward.3} parent=0 // pred_fallthru
    _
  // Predicated region
  $region22: #{conv_block_forward.3} parent=0 // pred_check
    _
  $region23: #{conv_block_forward.3} parent=0 // pred_check_branch
    %1214 = sbr.rel (0) target = $region25
  $region24: #{conv_block_forward.3} parent=0 // pred_region
    _
  $region25: #{conv_block_forward.3} parent=0 // pred_fallthru
    _
  // Predicated region
  $region26: #{conv_block_forward.3} parent=0 // pred_check
    _
  $region27: #{conv_block_forward.3} parent=0 // pred_check_branch
    %1216 = sbr.rel (0) target = $region29
  $region28: #{conv_block_forward.3} parent=0 // pred_region
    _
  $region29: #{conv_block_forward.3} parent=0 // pred_fallthru
    _
  // Predicated region
  $region30: #{conv_block_forward.3} parent=0 // pred_check
    _
  $region31: #{conv_block_forward.3} parent=0 // pred_check_branch
    %1218 = sbr.rel (0) target = $region33
  $region32: #{conv_block_forward.3} parent=0 // pred_region
    _
  $region33: #{conv_block_forward.3} parent=0 // pred_fallthru
    _
  // Predicated region
  $region34: #{conv_block_forward.3} parent=0 // pred_check
    _
  $region35: #{conv_block_forward.3} parent=0 // pred_check_branch
    %1220 = sbr.rel (0) target = $region37
  $region36: #{conv_block_forward.3} parent=0 // pred_region
    _
  $region37: #{conv_block_forward.3} parent=0 // pred_fallthru
    _
  // Predicated region
  $region38: #{conv_block_forward.3} parent=0 // pred_check
    _
  $region39: #{conv_block_forward.3} parent=0 // pred_check_branch
    %1222 = sbr.rel (0) target = $region41
  $region40: #{conv_block_forward.3} parent=0 // pred_region
    _
  $region41: #{conv_block_forward.3} parent=0 // pred_fallthru
    _

</llo_original>
